<compile_context>
chip_gen: v7x
topology: tpu7x:2x2x1
jax: 0.10.0
libtpu: 0.0.40
codegen_flags: <defaults>
</compile_context>

<pallas_src>
import functools

import jax
import jax.numpy as jnp
import numpy as np
from jax import lax
from jax.experimental import pallas as pl
from jax.experimental.pallas import tpu as pltpu


# ----------------------------------------------------------------------------
# Fused Pallas kernel
# ----------------------------------------------------------------------------
def _fused_adv_loss_kernel(p1_ref, w1_ref, w2_ref, b2_ref, mask_ref,
                           rwt_ref, rh_ref, o_ref, ypad_ref,
                           *, n_batch, ho, wo, c1, k2, hm,
                           negative_slope, inv_count):
    # ---- conv1 (+ folded bias): im2col matmul on the MXU, bf16 x bf16 -> f32
    y = jnp.dot(p1_ref[...], w1_ref[...], preferred_element_type=jnp.float32)
    y = jnp.where(y >= 0.0, y, negative_slope * y)        # LeakyReLU (f32, VPU)

    # ---- stash activation: zero only the conv2 halo, one strided interior ---
    ypad_ref[:, 0:1, :, :] = jnp.zeros((n_batch, 1, wo + 2, c1), jnp.float32)
    ypad_ref[:, ho + 1:ho + 2, :, :] = jnp.zeros((n_batch, 1, wo + 2, c1),
                                                 jnp.float32)
    ypad_ref[:, :, 0:1, :] = jnp.zeros((n_batch, ho + 2, 1, c1), jnp.float32)
    ypad_ref[:, :, wo + 1:wo + 2, :] = jnp.zeros((n_batch, ho + 2, 1, c1),
                                                 jnp.float32)
    ypad_ref[:, 1:1 + ho, 1:1 + wo, :] = y.reshape(n_batch, ho, wo, c1)

    # ---- conv2 (Cout=1, k=3, s=1, p=1): 9 tap-FMAs on the VPU --------------
    # (at realistic sizes, switch to a lane-dense (rows, Wo*C1) tap layout with
    #  pltpu.roll for the j-shifts; at this toy size the 4-D windows are fine)
    w2 = w2_ref[...]                                       # (k2*k2, C1) f32
    acc = ypad_ref[:, 0:ho, 0:wo, :] * w2[0:1, :]          # tap (0, 0)
    for t in range(1, k2 * k2):
        i, j = divmod(t, k2)
        acc = acc + ypad_ref[:, i:i + ho, j:j + wo, :] * w2[t:t + 1, :]
    out2 = jnp.sum(acc, axis=-1) + b2_ref[0, 0]            # (N, Ho, Wo)

    # ---- softplus(-x), numerically stable (f32 epilogue, v5e-safe) ----------
    z = -out2
    sp = jnp.maximum(z, 0.0) + jnp.log(1.0 + jnp.exp(-jnp.abs(z)))

    # ---- bilinear(mask): W-interp = one matmul, H-interp = batched matmul ---
    wmask = jnp.dot(mask_ref[...], rwt_ref[...],
                    preferred_element_type=jnp.float32)    # (N*Hm, Wd)
    wmask3 = wmask.reshape(n_batch, hm, wo)                # leading-dim split
    rh_b = jnp.broadcast_to(rh_ref[...], (n_batch, ho, hm))
    interp = jnp.einsum('nik,nkj->nij', rh_b, wmask3,
                        preferred_element_type=jnp.float32)  # (N, Hd, Wd)

    # ---- masked mean: one elementwise product + one reduce ------------------
    total = jnp.sum(sp * interp)
    o_ref[...] = (total * inv_count) * jnp.ones((1, 1), jnp.float32)


# ----------------------------------------------------------------------------
# Plain-JAX / numpy glue (conv1 patches, weight layouts, interpolation matrices)
# ----------------------------------------------------------------------------
def im2col(x, kh, kw, stride, pad):
    """x: (N,C,H,W) -> patches (N*Ho*Wo, C*kh*kw) matching torch weight order."""
    x = jnp.pad(x, ((0, 0), (0, 0), (pad, pad), (pad, pad)))
    N, C, H, W = x.shape
    Ho = (H - kh) // stride + 1
    Wo = (W - kw) // stride + 1
    cols = []
    for i in range(kh):
        for j in range(kw):
            cols.append(x[:, :, i:i + stride * Ho:stride, j:j + stride * Wo:stride])
    patches = jnp.stack(cols, axis=2)            # (N, C, kh*kw, Ho, Wo)
    patches = patches.transpose(0, 3, 4, 1, 2)   # (N, Ho, Wo, C, kh*kw)
    return patches.reshape(N * Ho * Wo, C * kh * kw), Ho, Wo


def interp_matrix_np(out_size, in_size):
    """PyTorch bilinear (align_corners=False) 1-D interpolation matrix (numpy)."""
    scale = in_size / out_size
    i = np.arange(out_size, dtype=np.float64)
    src = np.maximum((i + 0.5) * scale - 0.5, 0.0)
    i0 = np.minimum(np.floor(src).astype(np.int64), in_size - 1)
    i1 = np.minimum(i0 + 1, in_size - 1)
    lam = (src - i0).astype(np.float32)
    rows = np.arange(out_size)
    R = np.zeros((out_size, in_size), np.float32)
    np.add.at(R, (rows, i0), 1.0 - lam)
    np.add.at(R, (rows, i1), lam)
    return R


def init_discriminator_params(key):
    """Conv2d(4,32,k=4,s=2,p=1) + LeakyReLU(0.2) + Conv2d(32,1,k=3,s=1,p=1)."""
    k1, k2, k3, k4 = jax.random.split(key, 4)
    w1 = 0.05 * jax.random.normal(k1, (32, 4, 4, 4), jnp.float32)   # OIHW
    b1 = 0.01 * jax.random.normal(k2, (32,), jnp.float32)
    w2 = 0.05 * jax.random.normal(k3, (1, 32, 3, 3), jnp.float32)   # OIHW
    b2 = 0.01 * jax.random.normal(k4, (1,), jnp.float32)
    return (w1, b1, w2, b2)


def generator_adversarial_loss(fake, mask, params):
    """Fused Pallas implementation of GeneratorAdversarialLoss.forward."""
    w1, b1, w2, b2 = params
    N = fake.shape[0]
    C1 = w1.shape[0]               # conv1 out channels (32)
    kh1 = w1.shape[2]              # 4
    k2 = w2.shape[2]               # 3
    assert w2.shape[0] == 1 and w2.shape[2] == w2.shape[3] == 3

    # conv1 im2col patches (wrapper-side; tiny at these shapes).
    # TODO(synk): for realistic image sizes, extract the conv1 patches inside
    # the kernel from a VMEM-resident NHWC tile and add an M-tiled "parallel"
    # grid with an explicit vmem_limit (mandatory on v7x: 64 MiB VMEM / 2 TCs).
    p1, Ho, Wo = im2col(fake, kh1, kh1, stride=2, pad=1)    # (M, K) f32
    M, K = p1.shape
    Kp = ((K + 1 + 127) // 128) * 128                       # 64 -> 128

    # conv1 operand: K zero-padded to a 128-lane multiple, bias folded in via a
    # ones column (full-lane bf16 loads, no separate bias-add VPU pass).
    p1p = jnp.concatenate(
        [p1, jnp.ones((M, 1), p1.dtype), jnp.zeros((M, Kp - K - 1), p1.dtype)],
        axis=1).astype(jnp.bfloat16)
    w1t = w1.reshape(C1, K).T                                # (K, C1)
    w1p = jnp.concatenate(
        [w1t, b1.reshape(1, C1), jnp.zeros((Kp - K - 1, C1), jnp.float32)],
        axis=0).astype(jnp.bfloat16)

    # conv2 weights in (tap, channel) layout for the in-kernel VPU reduction.
    w2t = jnp.transpose(w2[0], (1, 2, 0)).reshape(k2 * k2, C1).astype(jnp.float32)
    b2r = b2.reshape(1, 1).astype(jnp.float32)

    Hd, Wd = Ho, Wo                # conv2 is k3/s1/p1 -> same spatial size
    Hm, Wm = mask.shape[-2:]

    # Bilinear interpolation matrices (numpy at trace time, static shapes).
    rh = jnp.asarray(interp_matrix_np(Hd, Hm))               # (Hd, Hm)
    rwt = jnp.asarray(interp_matrix_np(Wd, Wm).T)             # (Wm, Wd)
    mask2d = mask[:, 0].reshape(N * Hm, Wm).astype(jnp.float32)

    kernel = functools.partial(
        _fused_adv_loss_kernel,
        n_batch=N, ho=Ho, wo=Wo, c1=C1, k2=k2, hm=Hm,
        negative_slope=0.2, inv_count=1.0 / float(N * 1 * Hd * Wd))

    total = pl.pallas_call(
        kernel,
        out_shape=jax.ShapeDtypeStruct((1, 1), jnp.float32),
        in_specs=[
            pl.BlockSpec(p1p.shape, lambda: (0, 0)),        # conv1 patches (bf16)
            pl.BlockSpec(w1p.shape, lambda: (0, 0)),        # conv1 weight+bias (bf16)
            pl.BlockSpec(w2t.shape, lambda: (0, 0)),        # conv2 weight (f32)
            pl.BlockSpec(memory_space=pltpu.MemorySpace.SMEM),  # conv2 bias scalar
            pl.BlockSpec(mask2d.shape, lambda: (0, 0)),     # mask (N*Hm, Wm)
            pl.BlockSpec(rwt.shape, lambda: (0, 0)),        # Rw^T
            pl.BlockSpec(rh.shape, lambda: (0, 0)),         # Rh
        ],
        out_specs=pl.BlockSpec((1, 1), lambda: (0, 0)),
        scratch_shapes=[pltpu.VMEM((N, Ho + 2, Wo + 2, C1), jnp.float32)],
    )(p1p, w1p, w2t, b2r, mask2d, rwt, rh)
    return total[0, 0]


# ----------------------------------------------------------------------------
# Pure-JAX reference (same bf16 rounding of the conv1 MXU operands + bias)
# ----------------------------------------------------------------------------
def reference_loss(fake, mask, params):
    w1, b1, w2, b2 = params
    fk = fake.astype(jnp.bfloat16).astype(jnp.float32)
    w1r = w1.astype(jnp.bfloat16).astype(jnp.float32)
    b1r = b1.astype(jnp.bfloat16).astype(jnp.float32)
    dn = ("NCHW", "OIHW", "NCHW")
    y = lax.conv_general_dilated(fk, w1r, (2, 2), ((1, 1), (1, 1)),
                                 dimension_numbers=dn,
                                 precision=lax.Precision.HIGHEST)
    y = y + b1r[None, :, None, None]
    y = jnp.where(y >= 0, y, 0.2 * y)
    out = lax.conv_general_dilated(y, w2, (1, 1), ((1, 1), (1, 1)),
                                   dimension_numbers=dn,
                                   precision=lax.Precision.HIGHEST)
    out = out + b2[None, :, None, None]
    Hd, Wd = out.shape[-2:]
    Hm, Wm = mask.shape[-2:]
    rh = jnp.asarray(interp_matrix_np(Hd, Hm))
    rw = jnp.asarray(interp_matrix_np(Wd, Wm))
    interp = jnp.einsum("ij,ncjk,lk->ncil", rh, mask, rw,
                        precision=lax.Precision.HIGHEST)
    z = -out
    sp = jnp.maximum(z, 0.0) + jnp.log(1.0 + jnp.exp(-jnp.abs(z)))
    return jnp.mean(sp * interp)


# ----------------------------------------------------------------------------
if __name__ == "__main__":
    key = jax.random.PRNGKey(0)
    k_fake, k_mask, k_params = jax.random.split(key, 3)

    fake = jax.random.normal(k_fake, (2, 4, 16, 16), jnp.float32)    # NCHW
    mask = jax.random.uniform(k_mask, (2, 1, 16, 16), jnp.float32)   # NCHW
    params = init_discriminator_params(k_params)

    loss_fn = jax.jit(generator_adversarial_loss)
    loss = jax.block_until_ready(loss_fn(fake, mask, params))

    ref = jax.block_until_ready(reference_loss(fake, mask, params))
    np.testing.assert_allclose(np.asarray(loss), np.asarray(ref),
                               rtol=5e-4, atol=1e-5)

    print("KERNEL_OK")
</pallas_src>

<mosaic_0001>
module attributes {stable_mosaic.version = 11 : i64} {
  func.func @_fused_adv_loss_kernel(%arg0: memref<128x128xbf16, #tpu.memory_space<vmem>>, %arg1: memref<128x32xbf16, #tpu.memory_space<vmem>>, %arg2: memref<9x32xf32, #tpu.memory_space<vmem>>, %arg3: memref<1x1xf32, #tpu.memory_space<smem>>, %arg4: memref<32x16xf32, #tpu.memory_space<vmem>>, %arg5: memref<16x8xf32, #tpu.memory_space<vmem>>, %arg6: memref<8x16xf32, #tpu.memory_space<vmem>>, %arg7: memref<1x1xf32, #tpu.memory_space<vmem>>, %arg8: memref<2x10x10x32xf32, #tpu.memory_space<vmem>>) attributes {dimension_semantics = [], scalar_prefetch = 0 : i64, scratch_operands = 1 : i64, tpu.core_type = #tpu.core_type<tc>} {
    %c0 = arith.constant 0 : index
    %c0_0 = arith.constant 0 : index
    %0 = vector.load %arg0[%c0, %c0_0] : memref<128x128xbf16, #tpu.memory_space<vmem>>, vector<128x128xbf16>
    %c0_1 = arith.constant 0 : index
    %c0_2 = arith.constant 0 : index
    %1 = vector.load %arg1[%c0_1, %c0_2] : memref<128x32xbf16, #tpu.memory_space<vmem>>, vector<128x32xbf16>
    %cst = arith.constant dense<0.000000e+00> : vector<128x32xf32>
    %2 = tpu.matmul %0, %1, %cst {dimension_numbers = #tpu.dot_dimension_numbers<[1], [0], [0], [1], [0, 0, 1, 1], [], []>} : vector<128x128xbf16>, vector<128x32xbf16>, vector<128x32xf32> -> vector<128x32xf32>
    %cst_3 = arith.constant 0.000000e+00 : f32
    %3 = vector.broadcast %cst_3 : f32 to vector<128x32xf32>
    %4 = arith.cmpf oge, %2, %3 : vector<128x32xf32>
    %cst_4 = arith.constant 2.000000e-01 : f32
    %5 = vector.broadcast %cst_4 : f32 to vector<128x32xf32>
    %6 = arith.mulf %5, %2 : vector<128x32xf32>
    %7 = arith.select %4, %2, %6 : vector<128x32xi1>, vector<128x32xf32>
    %cst_5 = arith.constant 0.000000e+00 : f32
    %8 = vector.broadcast %cst_5 : f32 to vector<2x1x10x32xf32>
    %c0_6 = arith.constant 0 : index
    %c0_7 = arith.constant 0 : index
    %c0_8 = arith.constant 0 : index
    %c0_9 = arith.constant 0 : index
    %9 = vector.load %arg8[%c0_6, %c0_7, %c0_8, %c0_9] : memref<2x10x10x32xf32, #tpu.memory_space<vmem>>, vector<2x1x10x32xf32>
    tpu.vector_store %arg8[%c0_6, %c0_7, %c0_8, %c0_9], %8 {strides = array<i32>} : memref<2x10x10x32xf32, #tpu.memory_space<vmem>>, vector<2x1x10x32xf32>,
    %cst_10 = arith.constant 0.000000e+00 : f32
    %10 = vector.broadcast %cst_10 : f32 to vector<2x1x10x32xf32>
    %c0_11 = arith.constant 0 : index
    %c9 = arith.constant 9 : index
    %c0_12 = arith.constant 0 : index
    %c0_13 = arith.constant 0 : index
    %11 = vector.load %arg8[%c0_11, %c9, %c0_12, %c0_13] : memref<2x10x10x32xf32, #tpu.memory_space<vmem>>, vector<2x1x10x32xf32>
    tpu.vector_store %arg8[%c0_11, %c9, %c0_12, %c0_13], %10 {strides = array<i32>} : memref<2x10x10x32xf32, #tpu.memory_space<vmem>>, vector<2x1x10x32xf32>,
    %cst_14 = arith.constant 0.000000e+00 : f32
    %12 = vector.broadcast %cst_14 : f32 to vector<2x10x1x32xf32>
    %c0_15 = arith.constant 0 : index
    %c0_16 = arith.constant 0 : index
    %c0_17 = arith.constant 0 : index
    %c0_18 = arith.constant 0 : index
    %13 = vector.load %arg8[%c0_15, %c0_16, %c0_17, %c0_18] : memref<2x10x10x32xf32, #tpu.memory_space<vmem>>, vector<2x10x1x32xf32>
    tpu.vector_store %arg8[%c0_15, %c0_16, %c0_17, %c0_18], %12 {strides = array<i32>} : memref<2x10x10x32xf32, #tpu.memory_space<vmem>>, vector<2x10x1x32xf32>,
    %cst_19 = arith.constant 0.000000e+00 : f32
    %14 = vector.broadcast %cst_19 : f32 to vector<2x10x1x32xf32>
    %c0_20 = arith.constant 0 : index
    %c0_21 = arith.constant 0 : index
    %c9_22 = arith.constant 9 : index
    %c0_23 = arith.constant 0 : index
    %15 = vector.load %arg8[%c0_20, %c0_21, %c9_22, %c0_23] : memref<2x10x10x32xf32, #tpu.memory_space<vmem>>, vector<2x10x1x32xf32>
    tpu.vector_store %arg8[%c0_20, %c0_21, %c9_22, %c0_23], %14 {strides = array<i32>} : memref<2x10x10x32xf32, #tpu.memory_space<vmem>>, vector<2x10x1x32xf32>,
    %16 = vector.shape_cast %7 : vector<128x32xf32> to vector<2x8x8x32xf32>
    %c0_24 = arith.constant 0 : index
    %c1 = arith.constant 1 : index
    %c1_25 = arith.constant 1 : index
    %c0_26 = arith.constant 0 : index
    %17 = vector.load %arg8[%c0_24, %c1, %c1_25, %c0_26] : memref<2x10x10x32xf32, #tpu.memory_space<vmem>>, vector<2x8x8x32xf32>
    tpu.vector_store %arg8[%c0_24, %c1, %c1_25, %c0_26], %16 {strides = array<i32>} : memref<2x10x10x32xf32, #tpu.memory_space<vmem>>, vector<2x8x8x32xf32>,
    %c0_27 = arith.constant 0 : index
    %c0_28 = arith.constant 0 : index
    %18 = vector.load %arg2[%c0_27, %c0_28] : memref<9x32xf32, #tpu.memory_space<vmem>>, vector<9x32xf32>
    %c0_29 = arith.constant 0 : index
    %c0_30 = arith.constant 0 : index
    %c0_31 = arith.constant 0 : index
    %c0_32 = arith.constant 0 : index
    %19 = vector.load %arg8[%c0_29, %c0_30, %c0_31, %c0_32] : memref<2x10x10x32xf32, #tpu.memory_space<vmem>>, vector<2x8x8x32xf32>
    %20 = vector.extract_strided_slice %18 {offsets = [0, 0], sizes = [1, 32], strides = [1, 1]} : vector<9x32xf32> to vector<1x32xf32>
    %21 = vector.shape_cast %20 : vector<1x32xf32> to vector<1x1x1x32xf32>
    %22 = vector.broadcast %21 : vector<1x1x1x32xf32> to vector<2x8x8x32xf32>
    %23 = arith.mulf %19, %22 : vector<2x8x8x32xf32>
    %c0_33 = arith.constant 0 : index
    %c0_34 = arith.constant 0 : index
    %c1_35 = arith.constant 1 : index
    %c0_36 = arith.constant 0 : index
    %24 = vector.load %arg8[%c0_33, %c0_34, %c1_35, %c0_36] : memref<2x10x10x32xf32, #tpu.memory_space<vmem>>, vector<2x8x8x32xf32>
    %25 = vector.extract_strided_slice %18 {offsets = [1, 0], sizes = [1, 32], strides = [1, 1]} : vector<9x32xf32> to vector<1x32xf32>
    %26 = vector.shape_cast %25 : vector<1x32xf32> to vector<1x1x1x32xf32>
    %27 = vector.broadcast %26 : vector<1x1x1x32xf32> to vector<2x8x8x32xf32>
    %28 = arith.mulf %24, %27 : vector<2x8x8x32xf32>
    %29 = arith.addf %23, %28 : vector<2x8x8x32xf32>
    %c0_37 = arith.constant 0 : index
    %c0_38 = arith.constant 0 : index
    %c2 = arith.constant 2 : index
    %c0_39 = arith.constant 0 : index
    %30 = vector.load %arg8[%c0_37, %c0_38, %c2, %c0_39] : memref<2x10x10x32xf32, #tpu.memory_space<vmem>>, vector<2x8x8x32xf32>
    %31 = vector.extract_strided_slice %18 {offsets = [2, 0], sizes = [1, 32], strides = [1, 1]} : vector<9x32xf32> to vector<1x32xf32>
    %32 = vector.shape_cast %31 : vector<1x32xf32> to vector<1x1x1x32xf32>
    %33 = vector.broadcast %32 : vector<1x1x1x32xf32> to vector<2x8x8x32xf32>
    %34 = arith.mulf %30, %33 : vector<2x8x8x32xf32>
    %35 = arith.addf %29, %34 : vector<2x8x8x32xf32>
    %c0_40 = arith.constant 0 : index
    %c1_41 = arith.constant 1 : index
    %c0_42 = arith.constant 0 : index
    %c0_43 = arith.constant 0 : index
    %36 = vector.load %arg8[%c0_40, %c1_41, %c0_42, %c0_43] : memref<2x10x10x32xf32, #tpu.memory_space<vmem>>, vector<2x8x8x32xf32>
    %37 = vector.extract_strided_slice %18 {offsets = [3, 0], sizes = [1, 32], strides = [1, 1]} : vector<9x32xf32> to vector<1x32xf32>
    %38 = vector.shape_cast %37 : vector<1x32xf32> to vector<1x1x1x32xf32>
    %39 = vector.broadcast %38 : vector<1x1x1x32xf32> to vector<2x8x8x32xf32>
    %40 = arith.mulf %36, %39 : vector<2x8x8x32xf32>
    %41 = arith.addf %35, %40 : vector<2x8x8x32xf32>
    %c0_44 = arith.constant 0 : index
    %c1_45 = arith.constant 1 : index
    %c1_46 = arith.constant 1 : index
    %c0_47 = arith.constant 0 : index
    %42 = vector.load %arg8[%c0_44, %c1_45, %c1_46, %c0_47] : memref<2x10x10x32xf32, #tpu.memory_space<vmem>>, vector<2x8x8x32xf32>
    %43 = vector.extract_strided_slice %18 {offsets = [4, 0], sizes = [1, 32], strides = [1, 1]} : vector<9x32xf32> to vector<1x32xf32>
    %44 = vector.shape_cast %43 : vector<1x32xf32> to vector<1x1x1x32xf32>
    %45 = vector.broadcast %44 : vector<1x1x1x32xf32> to vector<2x8x8x32xf32>
    %46 = arith.mulf %42, %45 : vector<2x8x8x32xf32>
    %47 = arith.addf %41, %46 : vector<2x8x8x32xf32>
    %c0_48 = arith.constant 0 : index
    %c1_49 = arith.constant 1 : index
    %c2_50 = arith.constant 2 : index
    %c0_51 = arith.constant 0 : index
    %48 = vector.load %arg8[%c0_48, %c1_49, %c2_50, %c0_51] : memref<2x10x10x32xf32, #tpu.memory_space<vmem>>, vector<2x8x8x32xf32>
    %49 = vector.extract_strided_slice %18 {offsets = [5, 0], sizes = [1, 32], strides = [1, 1]} : vector<9x32xf32> to vector<1x32xf32>
    %50 = vector.shape_cast %49 : vector<1x32xf32> to vector<1x1x1x32xf32>
    %51 = vector.broadcast %50 : vector<1x1x1x32xf32> to vector<2x8x8x32xf32>
    %52 = arith.mulf %48, %51 : vector<2x8x8x32xf32>
    %53 = arith.addf %47, %52 : vector<2x8x8x32xf32>
    %c0_52 = arith.constant 0 : index
    %c2_53 = arith.constant 2 : index
    %c0_54 = arith.constant 0 : index
    %c0_55 = arith.constant 0 : index
    %54 = vector.load %arg8[%c0_52, %c2_53, %c0_54, %c0_55] : memref<2x10x10x32xf32, #tpu.memory_space<vmem>>, vector<2x8x8x32xf32>
    %55 = vector.extract_strided_slice %18 {offsets = [6, 0], sizes = [1, 32], strides = [1, 1]} : vector<9x32xf32> to vector<1x32xf32>
    %56 = vector.shape_cast %55 : vector<1x32xf32> to vector<1x1x1x32xf32>
    %57 = vector.broadcast %56 : vector<1x1x1x32xf32> to vector<2x8x8x32xf32>
    %58 = arith.mulf %54, %57 : vector<2x8x8x32xf32>
    %59 = arith.addf %53, %58 : vector<2x8x8x32xf32>
    %c0_56 = arith.constant 0 : index
    %c2_57 = arith.constant 2 : index
    %c1_58 = arith.constant 1 : index
    %c0_59 = arith.constant 0 : index
    %60 = vector.load %arg8[%c0_56, %c2_57, %c1_58, %c0_59] : memref<2x10x10x32xf32, #tpu.memory_space<vmem>>, vector<2x8x8x32xf32>
    %61 = vector.extract_strided_slice %18 {offsets = [7, 0], sizes = [1, 32], strides = [1, 1]} : vector<9x32xf32> to vector<1x32xf32>
    %62 = vector.shape_cast %61 : vector<1x32xf32> to vector<1x1x1x32xf32>
    %63 = vector.broadcast %62 : vector<1x1x1x32xf32> to vector<2x8x8x32xf32>
    %64 = arith.mulf %60, %63 : vector<2x8x8x32xf32>
    %65 = arith.addf %59, %64 : vector<2x8x8x32xf32>
    %c0_60 = arith.constant 0 : index
    %c2_61 = arith.constant 2 : index
    %c2_62 = arith.constant 2 : index
    %c0_63 = arith.constant 0 : index
    %66 = vector.load %arg8[%c0_60, %c2_61, %c2_62, %c0_63] : memref<2x10x10x32xf32, #tpu.memory_space<vmem>>, vector<2x8x8x32xf32>
    %67 = vector.extract_strided_slice %18 {offsets = [8, 0], sizes = [1, 32], strides = [1, 1]} : vector<9x32xf32> to vector<1x32xf32>
    %68 = vector.shape_cast %67 : vector<1x32xf32> to vector<1x1x1x32xf32>
    %69 = vector.broadcast %68 : vector<1x1x1x32xf32> to vector<2x8x8x32xf32>
    %70 = arith.mulf %66, %69 : vector<2x8x8x32xf32>
    %71 = arith.addf %65, %70 : vector<2x8x8x32xf32>
    %cst_64 = arith.constant dense<0.000000e+00> : vector<2x8x8xf32>
    %72 = vector.multi_reduction <add>, %71, %cst_64 [3] : vector<2x8x8x32xf32> to vector<2x8x8xf32>
    %c0_65 = arith.constant 0 : index
    %c0_66 = arith.constant 0 : index
    %73 = memref.load %arg3[%c0_65, %c0_66] : memref<1x1xf32, #tpu.memory_space<smem>>
    %74 = vector.broadcast %73 : f32 to vector<2x8x8xf32>
    %75 = arith.addf %72, %74 : vector<2x8x8xf32>
    %cst_67 = arith.constant 0.000000e+00 : f32
    %76 = vector.broadcast %cst_67 : f32 to vector<2x8x8xf32>
    %77 = arith.subf %76, %75 : vector<2x8x8xf32>
    %cst_68 = arith.constant 0.000000e+00 : f32
    %78 = vector.broadcast %cst_68 : f32 to vector<2x8x8xf32>
    %79 = arith.maximumf %77, %78 : vector<2x8x8xf32>
    %80 = math.absf %77 : vector<2x8x8xf32>
    %cst_69 = arith.constant 0.000000e+00 : f32
    %81 = vector.broadcast %cst_69 : f32 to vector<2x8x8xf32>
    %82 = arith.subf %81, %80 : vector<2x8x8xf32>
    %83 = math.exp %82 : vector<2x8x8xf32>
    %cst_70 = arith.constant 1.000000e+00 : f32
    %84 = vector.broadcast %cst_70 : f32 to vector<2x8x8xf32>
    %85 = arith.addf %84, %83 : vector<2x8x8xf32>
    %86 = math.log %85 : vector<2x8x8xf32>
    %87 = arith.addf %79, %86 : vector<2x8x8xf32>
    %c0_71 = arith.constant 0 : index
    %c0_72 = arith.constant 0 : index
    %88 = vector.load %arg4[%c0_71, %c0_72] : memref<32x16xf32, #tpu.memory_space<vmem>>, vector<32x16xf32>
    %c0_73 = arith.constant 0 : index
    %c0_74 = arith.constant 0 : index
    %89 = vector.load %arg5[%c0_73, %c0_74] : memref<16x8xf32, #tpu.memory_space<vmem>>, vector<16x8xf32>
    %cst_75 = arith.constant dense<0.000000e+00> : vector<32x8xf32>
    %90 = tpu.matmul %88, %89, %cst_75 {dimension_numbers = #tpu.dot_dimension_numbers<[1], [0], [0], [1], [0, 0, 1, 1], [], []>} : vector<32x16xf32>, vector<16x8xf32>, vector<32x8xf32> -> vector<32x8xf32>
    %91 = vector.shape_cast %90 : vector<32x8xf32> to vector<2x16x8xf32>
    %c0_76 = arith.constant 0 : index
    %c0_77 = arith.constant 0 : index
    %92 = vector.load %arg6[%c0_76, %c0_77] : memref<8x16xf32, #tpu.memory_space<vmem>>, vector<8x16xf32>
    %93 = vector.shape_cast %92 : vector<8x16xf32> to vector<1x8x16xf32>
    %94 = vector.broadcast %93 : vector<1x8x16xf32> to vector<2x8x16xf32>
    "tpu.trace_start"() <{level = 10 : i32, message = "nik,nkj->nij"}> : () -> ()
    %cst_78 = arith.constant dense<0.000000e+00> : vector<2x8x8xf32>
    %95 = tpu.matmul %94, %91, %cst_78 {dimension_numbers = #tpu.dot_dimension_numbers<[2], [1], [1], [2], [0, 0, 0, 1, 1, 2], [0], [0]>} : vector<2x8x16xf32>, vector<2x16x8xf32>, vector<2x8x8xf32> -> vector<2x8x8xf32>
    "tpu.trace_stop"() : () -> ()
    %96 = arith.mulf %87, %95 : vector<2x8x8xf32>
    %97 = vector.shape_cast %96 : vector<2x8x8xf32> to vector<1x2x8x8xf32>
    %cst_79 = arith.constant dense<0.000000e+00> : vector<1xf32>
    %98 = vector.multi_reduction <add>, %97, %cst_79 [1, 2, 3] : vector<1x2x8x8xf32> to vector<1xf32>
    %99 = vector.shape_cast %98 : vector<1xf32> to vector<1x1x1x1xf32>
    %100 = vector.extract %99[0, 0, 0, 0] : f32 from vector<1x1x1x1xf32>
    %cst_80 = arith.constant 7.812500e-03 : f32
    %101 = arith.mulf %100, %cst_80 : f32
    %cst_81 = arith.constant 1.000000e+00 : f32
    %102 = vector.broadcast %cst_81 : f32 to vector<1x1xf32>
    %103 = vector.broadcast %101 : f32 to vector<1x1xf32>
    %104 = arith.mulf %103, %102 : vector<1x1xf32>
    %c0_82 = arith.constant 0 : index
    %c0_83 = arith.constant 0 : index
    %105 = vector.load %arg7[%c0_82, %c0_83] : memref<1x1xf32, #tpu.memory_space<vmem>>, vector<1x1xf32>
    tpu.vector_store %arg7[%c0_82, %c0_83], %104 {strides = array<i32>} : memref<1x1xf32, #tpu.memory_space<vmem>>, vector<1x1xf32>,
    return
  }
}

</mosaic_0001>

<llo_original>
// kernel: generator_adversarial_loss.1
$region0: #{generator_adversarial_loss.1}
  #allocation0 [shape = 'u32[]', space=smem, size = 0x4, offset = 0x4, fixed_abs, tag = 'smem constant byte address 0x4 - core index']
  #allocation1 [shape = 'u32[144,128]{1,0:T(1,128)}', space=vmem, size = 0x12000, scoped, tag = 'internal scratch']
  #allocation2 [shape = 'f32[2,10,10,32]{3,2,1,0:T(8,128)}', space=vmem, size = 0x28000, scoped, tag = 'scratch operand']
  #allocation3 [shape = 'f32[1,1]{1,0:T(1,128)S(6)}', space=smem, size = 0x200, scoped, tag = 'scoped memory for generator_adversarial_loss.1']
  %s0 = inlined_call_operand.vmem [shape: bf16[128,128], index: 0, kind: input, shape index: {}]
  %s1 = inlined_call_operand.vmem [shape: bf16[128,32], index: 1, kind: input, shape index: {}]
  %s2 = inlined_call_operand.vmem [shape: f32[9,32], index: 2, kind: input, shape index: {}]
  %s3 = inlined_call_operand.<no memory space> [shape: f32[1,1], index: 3, kind: input, shape index: {}]
  %s4 = inlined_call_operand.vmem [shape: f32[32,16], index: 4, kind: input, shape index: {}]
  %s5 = inlined_call_operand.vmem [shape: f32[16,8], index: 5, kind: input, shape index: {}]
  %s6 = inlined_call_operand.vmem [shape: f32[8,16], index: 6, kind: input, shape index: {}]
  %s7 = inlined_call_operand.hbm [shape: f32[1,1], index: 7, kind: output, shape index: {}]
  %s8 = sld [smem:[#allocation0]]
  $region38: #{generator_adversarial_loss.1} parent=0
    _
  %s10 = ssub.s32 1, %s8
  %s11 = scalar_select 0, %s10, %s8
  %12 = sst [smem:[#allocation3]] %s3
  $region1: #{generator_adversarial_loss.1} parent=0
    #allocation4 [shape = 'u8[512]{0}', space=vmem, size = 0x400, scoped, tag = 'output window, operand 0, single buffered']
    #allocation5 [shape = 's32[1]{0}', space=sflag, size = 0x4, scoped, tag = 'scoped memory for generator_adversarial_loss.1']
    %13 = vsyncpa [#allocation5], 0
    // Predicated region
    $region2: #{generator_adversarial_loss.1} parent=1 // pred_check
      _
    $region3: #{generator_adversarial_loss.1} parent=1 // pred_check_branch
      %15 = sbr.rel (0) target = $region5
    $region4: #{generator_adversarial_loss.1} parent=1 // pred_region
      _
    $region5: #{generator_adversarial_loss.1} parent=1 // pred_fallthru
      _
    // Predicated region
    $region6: #{generator_adversarial_loss.1} parent=1 // pred_check
      _
    $region7: #{generator_adversarial_loss.1} parent=1 // pred_check_branch
      %17 = sbr.rel (0) target = $region9
    $region8: #{generator_adversarial_loss.1} parent=1 // pred_region
      _
    $region9: #{generator_adversarial_loss.1} parent=1 // pred_fallthru
      _
    // Predicated region
    $region10: #{generator_adversarial_loss.1} parent=1 // pred_check
      _
    $region11: #{generator_adversarial_loss.1} parent=1 // pred_check_branch
      %19 = sbr.rel (0) target = $region13
    $region12: #{generator_adversarial_loss.1} parent=1 // pred_region
      _
    $region13: #{generator_adversarial_loss.1} parent=1 // pred_fallthru
      _
    // Predicated region
    $region14: #{generator_adversarial_loss.1} parent=1 // pred_check
      _
    $region15: #{generator_adversarial_loss.1} parent=1 // pred_check_branch
      %21 = sbr.rel (0) target = $region17
    $region16: #{generator_adversarial_loss.1} parent=1 // pred_region
      _
    $region17: #{generator_adversarial_loss.1} parent=1 // pred_fallthru
      _
    // Predicated region
    $region18: #{generator_adversarial_loss.1} parent=1 // pred_check
      _
    $region19: #{generator_adversarial_loss.1} parent=1 // pred_check_branch
      %23 = sbr.rel (0) target = $region21
    $region20: #{generator_adversarial_loss.1} parent=1 // pred_region
      _
    $region21: #{generator_adversarial_loss.1} parent=1 // pred_fallthru
      _
    // Predicated region
    $region22: #{generator_adversarial_loss.1} parent=1 // pred_check
      _
    $region23: #{generator_adversarial_loss.1} parent=1 // pred_check_branch
      %25 = sbr.rel (0) target = $region25
    $region24: #{generator_adversarial_loss.1} parent=1 // pred_region
      _
    $region25: #{generator_adversarial_loss.1} parent=1 // pred_fallthru
      _
    // Predicated region
    $region26: #{generator_adversarial_loss.1} parent=1 // pred_check
      _
    $region27: #{generator_adversarial_loss.1} parent=1 // pred_check_branch
      %27 = sbr.rel (0) target = $region29
    $region28: #{generator_adversarial_loss.1} parent=1 // pred_region
      _
    $region29: #{generator_adversarial_loss.1} parent=1 // pred_fallthru
      _
    %v29 = vld [vmem:[%s0] sm:$0xf]
    %v30 = vld [vmem:[%s0 + $0x4] sm:$0xf]
    %v31 = vld [vmem:[%s0 + $0x8] sm:$0xf]
    %v32 = vld [vmem:[%s0 + $0xc] sm:$0xf]
    %v33 = vld [vmem:[%s0 + $0x10] sm:$0xf]
    %v34 = vld [vmem:[%s0 + $0x14] sm:$0xf]
    %v35 = vld [vmem:[%s0 + $0x18] sm:$0xf]
    %v36 = vld [vmem:[%s0 + $0x1c] sm:$0xf]
    %v37 = vld [vmem:[%s0 + $0x20] sm:$0xf]
    %v38 = vld [vmem:[%s0 + $0x24] sm:$0xf]
    %v39 = vld [vmem:[%s0 + $0x28] sm:$0xf]
    %v40 = vld [vmem:[%s0 + $0x2c] sm:$0xf]
    %v41 = vld [vmem:[%s0 + $0x30] sm:$0xf]
    %v42 = vld [vmem:[%s0 + $0x34] sm:$0xf]
    %v43 = vld [vmem:[%s0 + $0x38] sm:$0xf]
    %v44 = vld [vmem:[%s0 + $0x3c] sm:$0xf]
    %v45 = vld [vmem:[%s1] sm:$0xf]
    %v46 = vld [vmem:[%s1 + $0x4] sm:$0xf]
    %v47 = vld [vmem:[%s1 + $0x8] sm:$0xf]
    %v48 = vld [vmem:[%s1 + $0xc] sm:$0xf]
    %v49 = vld [vmem:[%s1 + $0x10] sm:$0xf]
    %v50 = vld [vmem:[%s1 + $0x14] sm:$0xf]
    %v51 = vld [vmem:[%s1 + $0x18] sm:$0xf]
    %v52 = vld [vmem:[%s1 + $0x1c] sm:$0xf]
    %v53 = vld [vmem:[%s1 + $0x20] sm:$0xf]
    %v54 = vld [vmem:[%s1 + $0x24] sm:$0xf]
    %v55 = vld [vmem:[%s1 + $0x28] sm:$0xf]
    %v56 = vld [vmem:[%s1 + $0x2c] sm:$0xf]
    %v57 = vld [vmem:[%s1 + $0x30] sm:$0xf]
    %v58 = vld [vmem:[%s1 + $0x34] sm:$0xf]
    %v59 = vld [vmem:[%s1 + $0x38] sm:$0xf]
    %v60 = vld [vmem:[%s1 + $0x3c] sm:$0xf]
    %v77 = vunpack.c.l.b16 %v29
    %v78 = vunpack.c.l.b16 %v30
    %v79 = vunpack.c.l.b16 %v31
    %v80 = vunpack.c.l.b16 %v32
    %v81 = vunpack.c.l.b16 %v33
    %v82 = vunpack.c.l.b16 %v34
    %v83 = vunpack.c.l.b16 %v35
    %v84 = vunpack.c.l.b16 %v36
    %v85 = vunpack.c.l.b16 %v37
    %v86 = vunpack.c.l.b16 %v38
    %v87 = vunpack.c.l.b16 %v39
    %v88 = vunpack.c.l.b16 %v40
    %v89 = vunpack.c.l.b16 %v41
    %v90 = vunpack.c.l.b16 %v42
    %v91 = vunpack.c.l.b16 %v43
    %v92 = vunpack.c.l.b16 %v44
    %v93 = vpack.c.b16 %v78, %v77
    %v94 = vpack.c.b16 %v80, %v79
    %v95 = vpack.c.b16 %v82, %v81
    %v96 = vpack.c.b16 %v84, %v83
    %v97 = vpack.c.b16 %v86, %v85
    %v98 = vpack.c.b16 %v88, %v87
    %v99 = vpack.c.b16 %v90, %v89
    %v100 = vpack.c.b16 %v92, %v91
    %v125 = vunpack.c.l.b16 %v45
    %v126 = vunpack.c.l.b16 %v46
    %v127 = vunpack.c.l.b16 %v47
    %v128 = vunpack.c.l.b16 %v48
    %v129 = vunpack.c.l.b16 %v49
    %v130 = vunpack.c.l.b16 %v50
    %v131 = vunpack.c.l.b16 %v51
    %v132 = vunpack.c.l.b16 %v52
    %v133 = vunpack.c.l.b16 %v53
    %v134 = vunpack.c.l.b16 %v54
    %v135 = vunpack.c.l.b16 %v55
    %v136 = vunpack.c.l.b16 %v56
    %v137 = vunpack.c.l.b16 %v57
    %v138 = vunpack.c.l.b16 %v58
    %v139 = vunpack.c.l.b16 %v59
    %v140 = vunpack.c.l.b16 %v60
    %v141 = vpack.c.b16 %v126, %v125
    %v142 = vpack.c.b16 %v128, %v127
    %v143 = vpack.c.b16 %v130, %v129
    %v144 = vpack.c.b16 %v132, %v131
    %v145 = vpack.c.b16 %v134, %v133
    %v146 = vpack.c.b16 %v136, %v135
    %v147 = vpack.c.b16 %v138, %v137
    %v148 = vpack.c.b16 %v140, %v139
    %157 = vmatprep.subr.bf16.mxu0 0
    %158 = vmatpush1.bf16.msra.mxu0 %v141
    %159 = vmatprep.subr.bf16.mxu0 0
    %160 = vmatpush1.bf16.msra.mxu0 %v142
    %161 = vmatprep.subr.bf16.mxu0 0
    %162 = vmatpush1.bf16.msra.mxu0 %v143
    %163 = vmatprep.subr.bf16.mxu0 0
    %164 = vmatpush1.bf16.msra.mxu0 %v144
    %165 = vmatprep.subr.bf16.mxu0 0
    %166 = vmatpush1.bf16.msra.mxu0 %v145
    %167 = vmatprep.subr.bf16.mxu0 0
    %168 = vmatpush1.bf16.msra.mxu0 %v146
    %169 = vmatprep.subr.bf16.mxu0 0
    %170 = vmatpush1.bf16.msra.mxu0 %v147
    %171 = vmatprep.subr.bf16.mxu0 0
    %172 = vmatpush1.bf16.msra.mxu0 %v148
    %173 = vmatprep.subr.bf16.mxu0 0
    %174 = vmatpush1.bf16.msra.mxu0 0
    %175 = vmatprep.subr.bf16.mxu0 0
    %176 = vmatpush1.bf16.msra.mxu0 0
    %177 = vmatprep.subr.bf16.mxu0 0
    %178 = vmatpush1.bf16.msra.mxu0 0
    %179 = vmatprep.subr.bf16.mxu0 0
    %180 = vmatpush1.bf16.msra.mxu0 0
    %181 = vmatprep.subr.bf16.mxu0 0
    %182 = vmatpush1.bf16.msra.mxu0 0
    %183 = vmatprep.subr.bf16.mxu0 0
    %184 = vmatpush1.bf16.msra.mxu0 0
    %185 = vmatprep.subr.bf16.mxu0 0
    %186 = vmatpush1.bf16.msra.mxu0 0
    %187 = vmatprep.subr.bf16.mxu0 0
    %188 = vmatpush1.bf16.msra.mxu0 0
    %189 = vmatprep.mubr.bf16.mxu0 0
    %190 = vmatmul.mubr.bf16.gmra.mrb[0].mxu0 %v93
    %v191 = vpop.f32.mrb[0].mxu0
    %v192 = vadd.f32 0.0, %v191
    %v193 = vpop.f32.mrb[0].mxu0
    %v194 = vpop.f32.mrb[0].mxu0
    %v195 = vadd.f32 0.0, %v194
    %v196 = vpop.f32.mrb[0].mxu0
    %197 = vmatprep.mubr.bf16.mxu0 0
    %198 = vmatmul.mubr.bf16.gmra.mrb[0].mxu0 %v94
    %v199 = vpop.f32.mrb[0].mxu0
    %v200 = vadd.f32 0.0, %v199
    %v201 = vpop.f32.mrb[0].mxu0
    %v202 = vpop.f32.mrb[0].mxu0
    %v203 = vadd.f32 0.0, %v202
    %v204 = vpop.f32.mrb[0].mxu0
    %205 = vmatprep.mubr.bf16.mxu0 0
    %206 = vmatmul.mubr.bf16.gmra.mrb[0].mxu0 %v95
    %v207 = vpop.f32.mrb[0].mxu0
    %v208 = vadd.f32 0.0, %v207
    %v209 = vpop.f32.mrb[0].mxu0
    %v210 = vpop.f32.mrb[0].mxu0
    %v211 = vadd.f32 0.0, %v210
    %v212 = vpop.f32.mrb[0].mxu0
    %213 = vmatprep.mubr.bf16.mxu0 0
    %214 = vmatmul.mubr.bf16.gmra.mrb[0].mxu0 %v96
    %v215 = vpop.f32.mrb[0].mxu0
    %v216 = vadd.f32 0.0, %v215
    %v217 = vpop.f32.mrb[0].mxu0
    %v218 = vpop.f32.mrb[0].mxu0
    %v219 = vadd.f32 0.0, %v218
    %v220 = vpop.f32.mrb[0].mxu0
    %221 = vmatprep.mubr.bf16.mxu0 0
    %222 = vmatmul.mubr.bf16.gmra.mrb[0].mxu0 %v97
    %v223 = vpop.f32.mrb[0].mxu0
    %v224 = vadd.f32 0.0, %v223
    %v225 = vpop.f32.mrb[0].mxu0
    %v226 = vpop.f32.mrb[0].mxu0
    %v227 = vadd.f32 0.0, %v226
    %v228 = vpop.f32.mrb[0].mxu0
    %229 = vmatprep.mubr.bf16.mxu0 0
    %230 = vmatmul.mubr.bf16.gmra.mrb[0].mxu0 %v98
    %v231 = vpop.f32.mrb[0].mxu0
    %v232 = vadd.f32 0.0, %v231
    %v233 = vpop.f32.mrb[0].mxu0
    %v234 = vpop.f32.mrb[0].mxu0
    %v235 = vadd.f32 0.0, %v234
    %v236 = vpop.f32.mrb[0].mxu0
    %237 = vmatprep.mubr.bf16.mxu0 0
    %238 = vmatmul.mubr.bf16.gmra.mrb[0].mxu0 %v99
    %v239 = vpop.f32.mrb[0].mxu0
    %v240 = vadd.f32 0.0, %v239
    %v241 = vpop.f32.mrb[0].mxu0
    %v242 = vpop.f32.mrb[0].mxu0
    %v243 = vadd.f32 0.0, %v242
    %v244 = vpop.f32.mrb[0].mxu0
    %245 = vmatprep.mubr.bf16.mxu0 0
    %246 = vmatmul.mubr.bf16.gmra.mrb[0].mxu0 %v100
    %v247 = vpop.f32.mrb[0].mxu0
    %v248 = vadd.f32 0.0, %v247
    %v249 = vpop.f32.mrb[0].mxu0
    %v250 = vpop.f32.mrb[0].mxu0
    %v251 = vadd.f32 0.0, %v250
    %v252 = vpop.f32.mrb[0].mxu0
    %253 = vdwg.mxu0
    %vm254 = vcmp.ge.f32.partialorder %v192, 0.0
    %vm255 = vcmp.ge.f32.partialorder %v195, 0.0
    %vm256 = vcmp.ge.f32.partialorder %v200, 0.0
    %vm257 = vcmp.ge.f32.partialorder %v203, 0.0
    %vm258 = vcmp.ge.f32.partialorder %v208, 0.0
    %vm259 = vcmp.ge.f32.partialorder %v211, 0.0
    %vm260 = vcmp.ge.f32.partialorder %v216, 0.0
    %vm261 = vcmp.ge.f32.partialorder %v219, 0.0
    %vm262 = vcmp.ge.f32.partialorder %v224, 0.0
    %vm263 = vcmp.ge.f32.partialorder %v227, 0.0
    %vm264 = vcmp.ge.f32.partialorder %v232, 0.0
    %vm265 = vcmp.ge.f32.partialorder %v235, 0.0
    %vm266 = vcmp.ge.f32.partialorder %v240, 0.0
    %vm267 = vcmp.ge.f32.partialorder %v243, 0.0
    %vm268 = vcmp.ge.f32.partialorder %v248, 0.0
    %vm269 = vcmp.ge.f32.partialorder %v251, 0.0
    %v270 = vmul.f32 %v192, 0.2
    %v271 = vmul.f32 %v195, 0.2
    %v272 = vmul.f32 %v200, 0.2
    %v273 = vmul.f32 %v203, 0.2
    %v274 = vmul.f32 %v208, 0.2
    %v275 = vmul.f32 %v211, 0.2
    %v276 = vmul.f32 %v216, 0.2
    %v277 = vmul.f32 %v219, 0.2
    %v278 = vmul.f32 %v224, 0.2
    %v279 = vmul.f32 %v227, 0.2
    %v280 = vmul.f32 %v232, 0.2
    %v281 = vmul.f32 %v235, 0.2
    %v282 = vmul.f32 %v240, 0.2
    %v283 = vmul.f32 %v243, 0.2
    %v284 = vmul.f32 %v248, 0.2
    %v285 = vmul.f32 %v251, 0.2
    %v286 = vsel %vm254, %v192, %v270
    %v287 = vsel %vm255, %v195, %v271
    %v288 = vsel %vm256, %v200, %v272
    %v289 = vsel %vm257, %v203, %v273
    %v290 = vsel %vm258, %v208, %v274
    %v291 = vsel %vm259, %v211, %v275
    %v292 = vsel %vm260, %v216, %v276
    %v293 = vsel %vm261, %v219, %v277
    %v294 = vsel %vm262, %v224, %v278
    %v295 = vsel %vm263, %v227, %v279
    %v296 = vsel %vm264, %v232, %v280
    %v297 = vsel %vm265, %v235, %v281
    %v298 = vsel %vm266, %v240, %v282
    %v299 = vsel %vm267, %v243, %v283
    %v300 = vsel %vm268, %v248, %v284
    %v301 = vsel %vm269, %v251, %v285
    %vm302 = vcmask 261120
    %303 = vst.msk [vmem:[#allocation2] sm:$0xff] %vm302, 0.0
    %vm304 = vcmask 254976
    %305 = vst.msk [vmem:[#allocation2 + $0x8] sm:$0x3] %vm304, 0.0
    %306 = vst.msk [vmem:[#allocation2 + $0xa0] sm:$0xff] %vm302, 0.0
    %307 = vst.msk [vmem:[#allocation2 + $0xa8] sm:$0x3] %vm304, 0.0
    %s308 = scalar_lea.vmem [#allocation2], 144
    %309 = vst.msk [vmem:[%s308] sm:$0xff] %vm302, 0.0
    %310 = vst.msk [vmem:[%s308 + $0x8] sm:$0x3] %vm304, 0.0
    %311 = vst.msk [vmem:[%s308 + $0xa0] sm:$0xff] %vm302, 0.0
    %312 = vst.msk [vmem:[%s308 + $0xa8] sm:$0x3] %vm304, 0.0
    %vm313 = vcmask 253952
    %314 = vst.msk [vmem:[#allocation2] sm:$0x1] %vm313, 0.0
    %315 = vst.msk [vmem:[#allocation2 + $0x10] sm:$0x1] %vm313, 0.0
    %316 = vst.msk [vmem:[#allocation2 + $0x20] sm:$0x1] %vm313, 0.0
    %317 = vst.msk [vmem:[#allocation2 + $0x30] sm:$0x1] %vm313, 0.0
    %318 = vst.msk [vmem:[#allocation2 + $0x40] sm:$0x1] %vm313, 0.0
    %319 = vst.msk [vmem:[#allocation2 + $0x50] sm:$0x1] %vm313, 0.0
    %320 = vst.msk [vmem:[#allocation2 + $0x60] sm:$0x1] %vm313, 0.0
    %321 = vst.msk [vmem:[#allocation2 + $0x70] sm:$0x1] %vm313, 0.0
    %322 = vst.msk [vmem:[#allocation2 + $0x80] sm:$0x1] %vm313, 0.0
    %323 = vst.msk [vmem:[#allocation2 + $0x90] sm:$0x1] %vm313, 0.0
    %324 = vst.msk [vmem:[#allocation2 + $0xa0] sm:$0x1] %vm313, 0.0
    %325 = vst.msk [vmem:[#allocation2 + $0xb0] sm:$0x1] %vm313, 0.0
    %326 = vst.msk [vmem:[#allocation2 + $0xc0] sm:$0x1] %vm313, 0.0
    %327 = vst.msk [vmem:[#allocation2 + $0xd0] sm:$0x1] %vm313, 0.0
    %328 = vst.msk [vmem:[#allocation2 + $0xe0] sm:$0x1] %vm313, 0.0
    %329 = vst.msk [vmem:[#allocation2 + $0xf0] sm:$0x1] %vm313, 0.0
    %330 = vst.msk [vmem:[#allocation2 + $0x100] sm:$0x1] %vm313, 0.0
    %331 = vst.msk [vmem:[#allocation2 + $0x110] sm:$0x1] %vm313, 0.0
    %332 = vst.msk [vmem:[#allocation2 + $0x120] sm:$0x1] %vm313, 0.0
    %333 = vst.msk [vmem:[#allocation2 + $0x130] sm:$0x1] %vm313, 0.0
    %334 = vst.msk [vmem:[#allocation2 + $0x9] sm:$0x1] %vm313, 0.0
    %335 = vst.msk [vmem:[#allocation2 + $0x19] sm:$0x1] %vm313, 0.0
    %336 = vst.msk [vmem:[#allocation2 + $0x29] sm:$0x1] %vm313, 0.0
    %337 = vst.msk [vmem:[#allocation2 + $0x39] sm:$0x1] %vm313, 0.0
    %338 = vst.msk [vmem:[#allocation2 + $0x49] sm:$0x1] %vm313, 0.0
    %339 = vst.msk [vmem:[#allocation2 + $0x59] sm:$0x1] %vm313, 0.0
    %340 = vst.msk [vmem:[#allocation2 + $0x69] sm:$0x1] %vm313, 0.0
    %341 = vst.msk [vmem:[#allocation2 + $0x79] sm:$0x1] %vm313, 0.0
    %342 = vst.msk [vmem:[#allocation2 + $0x89] sm:$0x1] %vm313, 0.0
    %343 = vst.msk [vmem:[#allocation2 + $0x99] sm:$0x1] %vm313, 0.0
    %344 = vst.msk [vmem:[#allocation2 + $0xa9] sm:$0x1] %vm313, 0.0
    %345 = vst.msk [vmem:[#allocation2 + $0xb9] sm:$0x1] %vm313, 0.0
    %346 = vst.msk [vmem:[#allocation2 + $0xc9] sm:$0x1] %vm313, 0.0
    %347 = vst.msk [vmem:[#allocation2 + $0xd9] sm:$0x1] %vm313, 0.0
    %348 = vst.msk [vmem:[#allocation2 + $0xe9] sm:$0x1] %vm313, 0.0
    %349 = vst.msk [vmem:[#allocation2 + $0xf9] sm:$0x1] %vm313, 0.0
    %350 = vst.msk [vmem:[#allocation2 + $0x109] sm:$0x1] %vm313, 0.0
    %351 = vst.msk [vmem:[#allocation2 + $0x119] sm:$0x1] %vm313, 0.0
    %352 = vst.msk [vmem:[#allocation2 + $0x129] sm:$0x1] %vm313, 0.0
    %353 = vst.msk [vmem:[#allocation2 + $0x139] sm:$0x1] %vm313, 0.0
    %s354 = scalar_lea.vmem [#allocation2], 16
    %355 = vst.msk [vmem:[%s354 + $0x1] sm:$0xff] %vm302, %v286
    %356 = vst.msk [vmem:[%s354 + $0x11] sm:$0xff] %vm302, %v287
    %357 = vst.msk [vmem:[%s354 + $0x21] sm:$0xff] %vm302, %v288
    %358 = vst.msk [vmem:[%s354 + $0x31] sm:$0xff] %vm302, %v289
    %359 = vst.msk [vmem:[%s354 + $0x41] sm:$0xff] %vm302, %v290
    %360 = vst.msk [vmem:[%s354 + $0x51] sm:$0xff] %vm302, %v291
    %361 = vst.msk [vmem:[%s354 + $0x61] sm:$0xff] %vm302, %v292
    %362 = vst.msk [vmem:[%s354 + $0x71] sm:$0xff] %vm302, %v293
    %363 = vst.msk [vmem:[%s354 + $0xa1] sm:$0xff] %vm302, %v294
    %364 = vst.msk [vmem:[%s354 + $0xb1] sm:$0xff] %vm302, %v295
    %365 = vst.msk [vmem:[%s354 + $0xc1] sm:$0xff] %vm302, %v296
    %366 = vst.msk [vmem:[%s354 + $0xd1] sm:$0xff] %vm302, %v297
    %367 = vst.msk [vmem:[%s354 + $0xe1] sm:$0xff] %vm302, %v298
    %368 = vst.msk [vmem:[%s354 + $0xf1] sm:$0xff] %vm302, %v299
    %369 = vst.msk [vmem:[%s354 + $0x101] sm:$0xff] %vm302, %v300
    %370 = vst.msk [vmem:[%s354 + $0x111] sm:$0xff] %vm302, %v301
    %v371 = vld [vmem:[%s2] sm:$0xff]
    %v372 = vld [vmem:[%s2 + $0x8] sm:$0x1]
    %v373 = vld [vmem:[#allocation2] sm:$0xff]
    %v374 = vld [vmem:[#allocation2 + $0x10] sm:$0xff]
    %v375 = vld [vmem:[#allocation2 + $0x20] sm:$0xff]
    %v376 = vld [vmem:[#allocation2 + $0x30] sm:$0xff]
    %v377 = vld [vmem:[#allocation2 + $0x40] sm:$0xff]
    %v378 = vld [vmem:[#allocation2 + $0x50] sm:$0xff]
    %v379 = vld [vmem:[#allocation2 + $0x60] sm:$0xff]
    %v380 = vld [vmem:[#allocation2 + $0x70] sm:$0xff]
    %v381 = vld [vmem:[#allocation2 + $0xa0] sm:$0xff]
    %v382 = vld [vmem:[#allocation2 + $0xb0] sm:$0xff]
    %v383 = vld [vmem:[#allocation2 + $0xc0] sm:$0xff]
    %v384 = vld [vmem:[#allocation2 + $0xd0] sm:$0xff]
    %v385 = vld [vmem:[#allocation2 + $0xe0] sm:$0xff]
    %v386 = vld [vmem:[#allocation2 + $0xf0] sm:$0xff]
    %v387 = vld [vmem:[#allocation2 + $0x100] sm:$0xff]
    %v388 = vld [vmem:[#allocation2 + $0x110] sm:$0xff]
    %v389 = vlaneseq
    %v390 = vshrl.u32 %v389, 7
    %v391 = vsub.s32 0, %v390
    %v392 = vrot.slane %v371, %v391
    %v393 = vmul.f32 %v373, %v392
    %v394 = vmul.f32 %v374, %v392
    %v395 = vmul.f32 %v375, %v392
    %v396 = vmul.f32 %v376, %v392
    %v397 = vmul.f32 %v377, %v392
    %v398 = vmul.f32 %v378, %v392
    %v399 = vmul.f32 %v379, %v392
    %v400 = vmul.f32 %v380, %v392
    %v401 = vmul.f32 %v381, %v392
    %v402 = vmul.f32 %v382, %v392
    %v403 = vmul.f32 %v383, %v392
    %v404 = vmul.f32 %v384, %v392
    %v405 = vmul.f32 %v385, %v392
    %v406 = vmul.f32 %v386, %v392
    %v407 = vmul.f32 %v387, %v392
    %v408 = vmul.f32 %v388, %v392
    %v409 = vld [vmem:[#allocation2 + $0x1] sm:$0xff]
    %v410 = vld [vmem:[#allocation2 + $0x11] sm:$0xff]
    %v411 = vld [vmem:[#allocation2 + $0x21] sm:$0xff]
    %v412 = vld [vmem:[#allocation2 + $0x31] sm:$0xff]
    %v413 = vld [vmem:[#allocation2 + $0x41] sm:$0xff]
    %v414 = vld [vmem:[#allocation2 + $0x51] sm:$0xff]
    %v415 = vld [vmem:[#allocation2 + $0x61] sm:$0xff]
    %v416 = vld [vmem:[#allocation2 + $0x71] sm:$0xff]
    %v417 = vld [vmem:[#allocation2 + $0xa1] sm:$0xff]
    %v418 = vld [vmem:[#allocation2 + $0xb1] sm:$0xff]
    %v419 = vld [vmem:[#allocation2 + $0xc1] sm:$0xff]
    %v420 = vld [vmem:[#allocation2 + $0xd1] sm:$0xff]
    %v421 = vld [vmem:[#allocation2 + $0xe1] sm:$0xff]
    %v422 = vld [vmem:[#allocation2 + $0xf1] sm:$0xff]
    %v423 = vld [vmem:[#allocation2 + $0x101] sm:$0xff]
    %v424 = vld [vmem:[#allocation2 + $0x111] sm:$0xff]
    %v425 = vlaneseq
    %v426 = vshrl.u32 %v425, 7
    %v427 = vsub.s32 1, %v426
    %v428 = vrot.slane %v371, %v427
    %v429 = vmul.f32 %v409, %v428
    %v430 = vmul.f32 %v410, %v428
    %v431 = vmul.f32 %v411, %v428
    %v432 = vmul.f32 %v412, %v428
    %v433 = vmul.f32 %v413, %v428
    %v434 = vmul.f32 %v414, %v428
    %v435 = vmul.f32 %v415, %v428
    %v436 = vmul.f32 %v416, %v428
    %v437 = vmul.f32 %v417, %v428
    %v438 = vmul.f32 %v418, %v428
    %v439 = vmul.f32 %v419, %v428
    %v440 = vmul.f32 %v420, %v428
    %v441 = vmul.f32 %v421, %v428
    %v442 = vmul.f32 %v422, %v428
    %v443 = vmul.f32 %v423, %v428
    %v444 = vmul.f32 %v424, %v428
    %v445 = vadd.f32 %v393, %v429
    %v446 = vadd.f32 %v394, %v430
    %v447 = vadd.f32 %v395, %v431
    %v448 = vadd.f32 %v396, %v432
    %v449 = vadd.f32 %v397, %v433
    %v450 = vadd.f32 %v398, %v434
    %v451 = vadd.f32 %v399, %v435
    %v452 = vadd.f32 %v400, %v436
    %v453 = vadd.f32 %v401, %v437
    %v454 = vadd.f32 %v402, %v438
    %v455 = vadd.f32 %v403, %v439
    %v456 = vadd.f32 %v404, %v440
    %v457 = vadd.f32 %v405, %v441
    %v458 = vadd.f32 %v406, %v442
    %v459 = vadd.f32 %v407, %v443
    %v460 = vadd.f32 %v408, %v444
    %v461 = vld [vmem:[#allocation2 + $0x2] sm:$0xff]
    %v462 = vld [vmem:[#allocation2 + $0x12] sm:$0xff]
    %v463 = vld [vmem:[#allocation2 + $0x22] sm:$0xff]
    %v464 = vld [vmem:[#allocation2 + $0x32] sm:$0xff]
    %v465 = vld [vmem:[#allocation2 + $0x42] sm:$0xff]
    %v466 = vld [vmem:[#allocation2 + $0x52] sm:$0xff]
    %v467 = vld [vmem:[#allocation2 + $0x62] sm:$0xff]
    %v468 = vld [vmem:[#allocation2 + $0x72] sm:$0xff]
    %v469 = vld [vmem:[#allocation2 + $0xa2] sm:$0xff]
    %v470 = vld [vmem:[#allocation2 + $0xb2] sm:$0xff]
    %v471 = vld [vmem:[#allocation2 + $0xc2] sm:$0xff]
    %v472 = vld [vmem:[#allocation2 + $0xd2] sm:$0xff]
    %v473 = vld [vmem:[#allocation2 + $0xe2] sm:$0xff]
    %v474 = vld [vmem:[#allocation2 + $0xf2] sm:$0xff]
    %v475 = vld [vmem:[#allocation2 + $0x102] sm:$0xff]
    %v476 = vld [vmem:[#allocation2 + $0x112] sm:$0xff]
    %v477 = vlaneseq
    %v478 = vshrl.u32 %v477, 7
    %v479 = vsub.s32 2, %v478
    %v480 = vrot.slane %v371, %v479
    %v481 = vmul.f32 %v461, %v480
    %v482 = vmul.f32 %v462, %v480
    %v483 = vmul.f32 %v463, %v480
    %v484 = vmul.f32 %v464, %v480
    %v485 = vmul.f32 %v465, %v480
    %v486 = vmul.f32 %v466, %v480
    %v487 = vmul.f32 %v467, %v480
    %v488 = vmul.f32 %v468, %v480
    %v489 = vmul.f32 %v469, %v480
    %v490 = vmul.f32 %v470, %v480
    %v491 = vmul.f32 %v471, %v480
    %v492 = vmul.f32 %v472, %v480
    %v493 = vmul.f32 %v473, %v480
    %v494 = vmul.f32 %v474, %v480
    %v495 = vmul.f32 %v475, %v480
    %v496 = vmul.f32 %v476, %v480
    %v497 = vadd.f32 %v445, %v481
    %v498 = vadd.f32 %v446, %v482
    %v499 = vadd.f32 %v447, %v483
    %v500 = vadd.f32 %v448, %v484
    %v501 = vadd.f32 %v449, %v485
    %v502 = vadd.f32 %v450, %v486
    %v503 = vadd.f32 %v451, %v487
    %v504 = vadd.f32 %v452, %v488
    %v505 = vadd.f32 %v453, %v489
    %v506 = vadd.f32 %v454, %v490
    %v507 = vadd.f32 %v455, %v491
    %v508 = vadd.f32 %v456, %v492
    %v509 = vadd.f32 %v457, %v493
    %v510 = vadd.f32 %v458, %v494
    %v511 = vadd.f32 %v459, %v495
    %v512 = vadd.f32 %v460, %v496
    %v513 = vld [vmem:[%s354] sm:$0xff]
    %v514 = vld [vmem:[%s354 + $0x10] sm:$0xff]
    %v515 = vld [vmem:[%s354 + $0x20] sm:$0xff]
    %v516 = vld [vmem:[%s354 + $0x30] sm:$0xff]
    %v517 = vld [vmem:[%s354 + $0x40] sm:$0xff]
    %v518 = vld [vmem:[%s354 + $0x50] sm:$0xff]
    %v519 = vld [vmem:[%s354 + $0x60] sm:$0xff]
    %v520 = vld [vmem:[%s354 + $0x70] sm:$0xff]
    %v521 = vld [vmem:[%s354 + $0xa0] sm:$0xff]
    %v522 = vld [vmem:[%s354 + $0xb0] sm:$0xff]
    %v523 = vld [vmem:[%s354 + $0xc0] sm:$0xff]
    %v524 = vld [vmem:[%s354 + $0xd0] sm:$0xff]
    %v525 = vld [vmem:[%s354 + $0xe0] sm:$0xff]
    %v526 = vld [vmem:[%s354 + $0xf0] sm:$0xff]
    %v527 = vld [vmem:[%s354 + $0x100] sm:$0xff]
    %v528 = vld [vmem:[%s354 + $0x110] sm:$0xff]
    %v529 = vlaneseq
    %v530 = vshrl.u32 %v529, 7
    %v531 = vsub.s32 3, %v530
    %v532 = vrot.slane %v371, %v531
    %v533 = vmul.f32 %v513, %v532
    %v534 = vmul.f32 %v514, %v532
    %v535 = vmul.f32 %v515, %v532
    %v536 = vmul.f32 %v516, %v532
    %v537 = vmul.f32 %v517, %v532
    %v538 = vmul.f32 %v518, %v532
    %v539 = vmul.f32 %v519, %v532
    %v540 = vmul.f32 %v520, %v532
    %v541 = vmul.f32 %v521, %v532
    %v542 = vmul.f32 %v522, %v532
    %v543 = vmul.f32 %v523, %v532
    %v544 = vmul.f32 %v524, %v532
    %v545 = vmul.f32 %v525, %v532
    %v546 = vmul.f32 %v526, %v532
    %v547 = vmul.f32 %v527, %v532
    %v548 = vmul.f32 %v528, %v532
    %v549 = vadd.f32 %v497, %v533
    %v550 = vadd.f32 %v498, %v534
    %v551 = vadd.f32 %v499, %v535
    %v552 = vadd.f32 %v500, %v536
    %v553 = vadd.f32 %v501, %v537
    %v554 = vadd.f32 %v502, %v538
    %v555 = vadd.f32 %v503, %v539
    %v556 = vadd.f32 %v504, %v540
    %v557 = vadd.f32 %v505, %v541
    %v558 = vadd.f32 %v506, %v542
    %v559 = vadd.f32 %v507, %v543
    %v560 = vadd.f32 %v508, %v544
    %v561 = vadd.f32 %v509, %v545
    %v562 = vadd.f32 %v510, %v546
    %v563 = vadd.f32 %v511, %v547
    %v564 = vadd.f32 %v512, %v548
    %v565 = vld [vmem:[%s354 + $0x1] sm:$0xff]
    %v566 = vld [vmem:[%s354 + $0x11] sm:$0xff]
    %v567 = vld [vmem:[%s354 + $0x21] sm:$0xff]
    %v568 = vld [vmem:[%s354 + $0x31] sm:$0xff]
    %v569 = vld [vmem:[%s354 + $0x41] sm:$0xff]
    %v570 = vld [vmem:[%s354 + $0x51] sm:$0xff]
    %v571 = vld [vmem:[%s354 + $0x61] sm:$0xff]
    %v572 = vld [vmem:[%s354 + $0x71] sm:$0xff]
    %v573 = vld [vmem:[%s354 + $0xa1] sm:$0xff]
    %v574 = vld [vmem:[%s354 + $0xb1] sm:$0xff]
    %v575 = vld [vmem:[%s354 + $0xc1] sm:$0xff]
    %v576 = vld [vmem:[%s354 + $0xd1] sm:$0xff]
    %v577 = vld [vmem:[%s354 + $0xe1] sm:$0xff]
    %v578 = vld [vmem:[%s354 + $0xf1] sm:$0xff]
    %v579 = vld [vmem:[%s354 + $0x101] sm:$0xff]
    %v580 = vld [vmem:[%s354 + $0x111] sm:$0xff]
    %v581 = vlaneseq
    %v582 = vshrl.u32 %v581, 7
    %v583 = vsub.s32 4, %v582
    %v584 = vrot.slane %v371, %v583
    %v585 = vmul.f32 %v565, %v584
    %v586 = vmul.f32 %v566, %v584
    %v587 = vmul.f32 %v567, %v584
    %v588 = vmul.f32 %v568, %v584
    %v589 = vmul.f32 %v569, %v584
    %v590 = vmul.f32 %v570, %v584
    %v591 = vmul.f32 %v571, %v584
    %v592 = vmul.f32 %v572, %v584
    %v593 = vmul.f32 %v573, %v584
    %v594 = vmul.f32 %v574, %v584
    %v595 = vmul.f32 %v575, %v584
    %v596 = vmul.f32 %v576, %v584
    %v597 = vmul.f32 %v577, %v584
    %v598 = vmul.f32 %v578, %v584
    %v599 = vmul.f32 %v579, %v584
    %v600 = vmul.f32 %v580, %v584
    %v601 = vadd.f32 %v549, %v585
    %v602 = vadd.f32 %v550, %v586
    %v603 = vadd.f32 %v551, %v587
    %v604 = vadd.f32 %v552, %v588
    %v605 = vadd.f32 %v553, %v589
    %v606 = vadd.f32 %v554, %v590
    %v607 = vadd.f32 %v555, %v591
    %v608 = vadd.f32 %v556, %v592
    %v609 = vadd.f32 %v557, %v593
    %v610 = vadd.f32 %v558, %v594
    %v611 = vadd.f32 %v559, %v595
    %v612 = vadd.f32 %v560, %v596
    %v613 = vadd.f32 %v561, %v597
    %v614 = vadd.f32 %v562, %v598
    %v615 = vadd.f32 %v563, %v599
    %v616 = vadd.f32 %v564, %v600
    %v617 = vld [vmem:[%s354 + $0x2] sm:$0xff]
    %v618 = vld [vmem:[%s354 + $0x12] sm:$0xff]
    %v619 = vld [vmem:[%s354 + $0x22] sm:$0xff]
    %v620 = vld [vmem:[%s354 + $0x32] sm:$0xff]
    %v621 = vld [vmem:[%s354 + $0x42] sm:$0xff]
    %v622 = vld [vmem:[%s354 + $0x52] sm:$0xff]
    %v623 = vld [vmem:[%s354 + $0x62] sm:$0xff]
    %v624 = vld [vmem:[%s354 + $0x72] sm:$0xff]
    %v625 = vld [vmem:[%s354 + $0xa2] sm:$0xff]
    %v626 = vld [vmem:[%s354 + $0xb2] sm:$0xff]
    %v627 = vld [vmem:[%s354 + $0xc2] sm:$0xff]
    %v628 = vld [vmem:[%s354 + $0xd2] sm:$0xff]
    %v629 = vld [vmem:[%s354 + $0xe2] sm:$0xff]
    %v630 = vld [vmem:[%s354 + $0xf2] sm:$0xff]
    %v631 = vld [vmem:[%s354 + $0x102] sm:$0xff]
    %v632 = vld [vmem:[%s354 + $0x112] sm:$0xff]
    %v633 = vlaneseq
    %v634 = vshrl.u32 %v633, 7
    %v635 = vsub.s32 5, %v634
    %v636 = vrot.slane %v371, %v635
    %v637 = vmul.f32 %v617, %v636
    %v638 = vmul.f32 %v618, %v636
    %v639 = vmul.f32 %v619, %v636
    %v640 = vmul.f32 %v620, %v636
    %v641 = vmul.f32 %v621, %v636
    %v642 = vmul.f32 %v622, %v636
    %v643 = vmul.f32 %v623, %v636
    %v644 = vmul.f32 %v624, %v636
    %v645 = vmul.f32 %v625, %v636
    %v646 = vmul.f32 %v626, %v636
    %v647 = vmul.f32 %v627, %v636
    %v648 = vmul.f32 %v628, %v636
    %v649 = vmul.f32 %v629, %v636
    %v650 = vmul.f32 %v630, %v636
    %v651 = vmul.f32 %v631, %v636
    %v652 = vmul.f32 %v632, %v636
    %v653 = vadd.f32 %v601, %v637
    %v654 = vadd.f32 %v602, %v638
    %v655 = vadd.f32 %v603, %v639
    %v656 = vadd.f32 %v604, %v640
    %v657 = vadd.f32 %v605, %v641
    %v658 = vadd.f32 %v606, %v642
    %v659 = vadd.f32 %v607, %v643
    %v660 = vadd.f32 %v608, %v644
    %v661 = vadd.f32 %v609, %v645
    %v662 = vadd.f32 %v610, %v646
    %v663 = vadd.f32 %v611, %v647
    %v664 = vadd.f32 %v612, %v648
    %v665 = vadd.f32 %v613, %v649
    %v666 = vadd.f32 %v614, %v650
    %v667 = vadd.f32 %v615, %v651
    %v668 = vadd.f32 %v616, %v652
    %s669 = scalar_lea.vmem [#allocation2], 32
    %v670 = vld [vmem:[%s669] sm:$0xff]
    %v671 = vld [vmem:[%s669 + $0x10] sm:$0xff]
    %v672 = vld [vmem:[%s669 + $0x20] sm:$0xff]
    %v673 = vld [vmem:[%s669 + $0x30] sm:$0xff]
    %v674 = vld [vmem:[%s669 + $0x40] sm:$0xff]
    %v675 = vld [vmem:[%s669 + $0x50] sm:$0xff]
    %v676 = vld [vmem:[%s669 + $0x60] sm:$0xff]
    %v677 = vld [vmem:[%s669 + $0x70] sm:$0xff]
    %v678 = vld [vmem:[%s669 + $0xa0] sm:$0xff]
    %v679 = vld [vmem:[%s669 + $0xb0] sm:$0xff]
    %v680 = vld [vmem:[%s669 + $0xc0] sm:$0xff]
    %v681 = vld [vmem:[%s669 + $0xd0] sm:$0xff]
    %v682 = vld [vmem:[%s669 + $0xe0] sm:$0xff]
    %v683 = vld [vmem:[%s669 + $0xf0] sm:$0xff]
    %v684 = vld [vmem:[%s669 + $0x100] sm:$0xff]
    %v685 = vld [vmem:[%s669 + $0x110] sm:$0xff]
    %v686 = vlaneseq
    %v687 = vshrl.u32 %v686, 7
    %v688 = vsub.s32 6, %v687
    %v689 = vrot.slane %v371, %v688
    %v690 = vmul.f32 %v670, %v689
    %v691 = vmul.f32 %v671, %v689
    %v692 = vmul.f32 %v672, %v689
    %v693 = vmul.f32 %v673, %v689
    %v694 = vmul.f32 %v674, %v689
    %v695 = vmul.f32 %v675, %v689
    %v696 = vmul.f32 %v676, %v689
    %v697 = vmul.f32 %v677, %v689
    %v698 = vmul.f32 %v678, %v689
    %v699 = vmul.f32 %v679, %v689
    %v700 = vmul.f32 %v680, %v689
    %v701 = vmul.f32 %v681, %v689
    %v702 = vmul.f32 %v682, %v689
    %v703 = vmul.f32 %v683, %v689
    %v704 = vmul.f32 %v684, %v689
    %v705 = vmul.f32 %v685, %v689
    %v706 = vadd.f32 %v653, %v690
    %v707 = vadd.f32 %v654, %v691
    %v708 = vadd.f32 %v655, %v692
    %v709 = vadd.f32 %v656, %v693
    %v710 = vadd.f32 %v657, %v694
    %v711 = vadd.f32 %v658, %v695
    %v712 = vadd.f32 %v659, %v696
    %v713 = vadd.f32 %v660, %v697
    %v714 = vadd.f32 %v661, %v698
    %v715 = vadd.f32 %v662, %v699
    %v716 = vadd.f32 %v663, %v700
    %v717 = vadd.f32 %v664, %v701
    %v718 = vadd.f32 %v665, %v702
    %v719 = vadd.f32 %v666, %v703
    %v720 = vadd.f32 %v667, %v704
    %v721 = vadd.f32 %v668, %v705
    %v722 = vld [vmem:[%s669 + $0x1] sm:$0xff]
    %v723 = vld [vmem:[%s669 + $0x11] sm:$0xff]
    %v724 = vld [vmem:[%s669 + $0x21] sm:$0xff]
    %v725 = vld [vmem:[%s669 + $0x31] sm:$0xff]
    %v726 = vld [vmem:[%s669 + $0x41] sm:$0xff]
    %v727 = vld [vmem:[%s669 + $0x51] sm:$0xff]
    %v728 = vld [vmem:[%s669 + $0x61] sm:$0xff]
    %v729 = vld [vmem:[%s669 + $0x71] sm:$0xff]
    %v730 = vld [vmem:[%s669 + $0xa1] sm:$0xff]
    %v731 = vld [vmem:[%s669 + $0xb1] sm:$0xff]
    %v732 = vld [vmem:[%s669 + $0xc1] sm:$0xff]
    %v733 = vld [vmem:[%s669 + $0xd1] sm:$0xff]
    %v734 = vld [vmem:[%s669 + $0xe1] sm:$0xff]
    %v735 = vld [vmem:[%s669 + $0xf1] sm:$0xff]
    %v736 = vld [vmem:[%s669 + $0x101] sm:$0xff]
    %v737 = vld [vmem:[%s669 + $0x111] sm:$0xff]
    %v738 = vlaneseq
    %v739 = vshrl.u32 %v738, 7
    %v740 = vsub.s32 7, %v739
    %v741 = vrot.slane %v371, %v740
    %v742 = vmul.f32 %v722, %v741
    %v743 = vmul.f32 %v723, %v741
    %v744 = vmul.f32 %v724, %v741
    %v745 = vmul.f32 %v725, %v741
    %v746 = vmul.f32 %v726, %v741
    %v747 = vmul.f32 %v727, %v741
    %v748 = vmul.f32 %v728, %v741
    %v749 = vmul.f32 %v729, %v741
    %v750 = vmul.f32 %v730, %v741
    %v751 = vmul.f32 %v731, %v741
    %v752 = vmul.f32 %v732, %v741
    %v753 = vmul.f32 %v733, %v741
    %v754 = vmul.f32 %v734, %v741
    %v755 = vmul.f32 %v735, %v741
    %v756 = vmul.f32 %v736, %v741
    %v757 = vmul.f32 %v737, %v741
    %v758 = vadd.f32 %v706, %v742
    %v759 = vadd.f32 %v707, %v743
    %v760 = vadd.f32 %v708, %v744
    %v761 = vadd.f32 %v709, %v745
    %v762 = vadd.f32 %v710, %v746
    %v763 = vadd.f32 %v711, %v747
    %v764 = vadd.f32 %v712, %v748
    %v765 = vadd.f32 %v713, %v749
    %v766 = vadd.f32 %v714, %v750
    %v767 = vadd.f32 %v715, %v751
    %v768 = vadd.f32 %v716, %v752
    %v769 = vadd.f32 %v717, %v753
    %v770 = vadd.f32 %v718, %v754
    %v771 = vadd.f32 %v719, %v755
    %v772 = vadd.f32 %v720, %v756
    %v773 = vadd.f32 %v721, %v757
    %v774 = vld [vmem:[%s669 + $0x2] sm:$0xff]
    %v775 = vld [vmem:[%s669 + $0x12] sm:$0xff]
    %v776 = vld [vmem:[%s669 + $0x22] sm:$0xff]
    %v777 = vld [vmem:[%s669 + $0x32] sm:$0xff]
    %v778 = vld [vmem:[%s669 + $0x42] sm:$0xff]
    %v779 = vld [vmem:[%s669 + $0x52] sm:$0xff]
    %v780 = vld [vmem:[%s669 + $0x62] sm:$0xff]
    %v781 = vld [vmem:[%s669 + $0x72] sm:$0xff]
    %v782 = vld [vmem:[%s669 + $0xa2] sm:$0xff]
    %v783 = vld [vmem:[%s669 + $0xb2] sm:$0xff]
    %v784 = vld [vmem:[%s669 + $0xc2] sm:$0xff]
    %v785 = vld [vmem:[%s669 + $0xd2] sm:$0xff]
    %v786 = vld [vmem:[%s669 + $0xe2] sm:$0xff]
    %v787 = vld [vmem:[%s669 + $0xf2] sm:$0xff]
    %v788 = vld [vmem:[%s669 + $0x102] sm:$0xff]
    %v789 = vld [vmem:[%s669 + $0x112] sm:$0xff]
    %v790 = vlaneseq
    %v791 = vshrl.u32 %v790, 7
    %v792 = vsub.s32 0, %v791
    %v793 = vrot.slane %v372, %v792
    %v794 = vmul.f32 %v774, %v793
    %v795 = vmul.f32 %v775, %v793
    %v796 = vmul.f32 %v776, %v793
    %v797 = vmul.f32 %v777, %v793
    %v798 = vmul.f32 %v778, %v793
    %v799 = vmul.f32 %v779, %v793
    %v800 = vmul.f32 %v780, %v793
    %v801 = vmul.f32 %v781, %v793
    %v802 = vmul.f32 %v782, %v793
    %v803 = vmul.f32 %v783, %v793
    %v804 = vmul.f32 %v784, %v793
    %v805 = vmul.f32 %v785, %v793
    %v806 = vmul.f32 %v786, %v793
    %v807 = vmul.f32 %v787, %v793
    %v808 = vmul.f32 %v788, %v793
    %v809 = vmul.f32 %v789, %v793
    %v810 = vadd.f32 %v758, %v794
    %v811 = vadd.f32 %v759, %v795
    %v812 = vadd.f32 %v760, %v796
    %v813 = vadd.f32 %v761, %v797
    %v814 = vadd.f32 %v762, %v798
    %v815 = vadd.f32 %v763, %v799
    %v816 = vadd.f32 %v764, %v800
    %v817 = vadd.f32 %v765, %v801
    %v818 = vadd.f32 %v766, %v802
    %v819 = vadd.f32 %v767, %v803
    %v820 = vadd.f32 %v768, %v804
    %v821 = vadd.f32 %v769, %v805
    %v822 = vadd.f32 %v770, %v806
    %v823 = vadd.f32 %v771, %v807
    %v824 = vadd.f32 %v772, %v808
    %v825 = vadd.f32 %v773, %v809
    %v826 = vsel %vm302, %v810, 0.0
    %827 = vadd.xlane.f32.xlu0 %v826
    %v828 = vpop.xlane.xlu0 %827
    %v829 = vsel %vm302, %v811, 0.0
    %830 = vadd.xlane.f32.xlu0 %v829
    %v831 = vpop.xlane.xlu0 %830
    %v832 = vsel %vm302, %v812, 0.0
    %833 = vadd.xlane.f32.xlu0 %v832
    %v834 = vpop.xlane.xlu0 %833
    %v835 = vsel %vm302, %v813, 0.0
    %836 = vadd.xlane.f32.xlu0 %v835
    %v837 = vpop.xlane.xlu0 %836
    %v838 = vsel %vm302, %v814, 0.0
    %839 = vadd.xlane.f32.xlu0 %v838
    %v840 = vpop.xlane.xlu0 %839
    %v841 = vsel %vm302, %v815, 0.0
    %842 = vadd.xlane.f32.xlu0 %v841
    %v843 = vpop.xlane.xlu0 %842
    %v844 = vsel %vm302, %v816, 0.0
    %845 = vadd.xlane.f32.xlu0 %v844
    %v846 = vpop.xlane.xlu0 %845
    %v847 = vsel %vm302, %v817, 0.0
    %848 = vadd.xlane.f32.xlu0 %v847
    %v849 = vpop.xlane.xlu0 %848
    %v850 = vsel %vm302, %v818, 0.0
    %851 = vadd.xlane.f32.xlu0 %v850
    %v852 = vpop.xlane.xlu0 %851
    %v853 = vsel %vm302, %v819, 0.0
    %854 = vadd.xlane.f32.xlu0 %v853
    %v855 = vpop.xlane.xlu0 %854
    %v856 = vsel %vm302, %v820, 0.0
    %857 = vadd.xlane.f32.xlu0 %v856
    %v858 = vpop.xlane.xlu0 %857
    %v859 = vsel %vm302, %v821, 0.0
    %860 = vadd.xlane.f32.xlu0 %v859
    %v861 = vpop.xlane.xlu0 %860
    %v862 = vsel %vm302, %v822, 0.0
    %863 = vadd.xlane.f32.xlu0 %v862
    %v864 = vpop.xlane.xlu0 %863
    %v865 = vsel %vm302, %v823, 0.0
    %866 = vadd.xlane.f32.xlu0 %v865
    %v867 = vpop.xlane.xlu0 %866
    %v868 = vsel %vm302, %v824, 0.0
    %869 = vadd.xlane.f32.xlu0 %v868
    %v870 = vpop.xlane.xlu0 %869
    %v871 = vsel %vm302, %v825, 0.0
    %872 = vadd.xlane.f32.xlu0 %v871
    %v873 = vpop.xlane.xlu0 %872
    %s874 = sld [smem:[#allocation3]]
    %v875 = vstv %s874
    %v876 = vadd.f32 %v828, %v875
    %v877 = vadd.f32 %v831, %v875
    %v878 = vadd.f32 %v834, %v875
    %v879 = vadd.f32 %v837, %v875
    %v880 = vadd.f32 %v840, %v875
    %v881 = vadd.f32 %v843, %v875
    %v882 = vadd.f32 %v846, %v875
    %v883 = vadd.f32 %v849, %v875
    %v884 = vadd.f32 %v852, %v875
    %v885 = vadd.f32 %v855, %v875
    %v886 = vadd.f32 %v858, %v875
    %v887 = vadd.f32 %v861, %v875
    %v888 = vadd.f32 %v864, %v875
    %v889 = vadd.f32 %v867, %v875
    %v890 = vadd.f32 %v870, %v875
    %v891 = vadd.f32 %v873, %v875
    %v892 = vsub.f32 0.0, %v876
    %v893 = vsub.f32 0.0, %v877
    %v894 = vsub.f32 0.0, %v878
    %v895 = vsub.f32 0.0, %v879
    %v896 = vsub.f32 0.0, %v880
    %v897 = vsub.f32 0.0, %v881
    %v898 = vsub.f32 0.0, %v882
    %v899 = vsub.f32 0.0, %v883
    %v900 = vsub.f32 0.0, %v884
    %v901 = vsub.f32 0.0, %v885
    %v902 = vsub.f32 0.0, %v886
    %v903 = vsub.f32 0.0, %v887
    %v904 = vsub.f32 0.0, %v888
    %v905 = vsub.f32 0.0, %v889
    %v906 = vsub.f32 0.0, %v890
    %v907 = vsub.f32 0.0, %v891
    %v908 = vmax.f32 %v892, 0.0
    %v909 = vmax.f32 %v893, 0.0
    %v910 = vmax.f32 %v894, 0.0
    %v911 = vmax.f32 %v895, 0.0
    %v912 = vmax.f32 %v896, 0.0
    %v913 = vmax.f32 %v897, 0.0
    %v914 = vmax.f32 %v898, 0.0
    %v915 = vmax.f32 %v899, 0.0
    %v916 = vmax.f32 %v900, 0.0
    %v917 = vmax.f32 %v901, 0.0
    %v918 = vmax.f32 %v902, 0.0
    %v919 = vmax.f32 %v903, 0.0
    %v920 = vmax.f32 %v904, 0.0
    %v921 = vmax.f32 %v905, 0.0
    %v922 = vmax.f32 %v906, 0.0
    %v923 = vmax.f32 %v907, 0.0
    %v924 = vand.u32 2147483647, %v892
    %v925 = vand.u32 2147483647, %v893
    %v926 = vand.u32 2147483647, %v894
    %v927 = vand.u32 2147483647, %v895
    %v928 = vand.u32 2147483647, %v896
    %v929 = vand.u32 2147483647, %v897
    %v930 = vand.u32 2147483647, %v898
    %v931 = vand.u32 2147483647, %v899
    %v932 = vand.u32 2147483647, %v900
    %v933 = vand.u32 2147483647, %v901
    %v934 = vand.u32 2147483647, %v902
    %v935 = vand.u32 2147483647, %v903
    %v936 = vand.u32 2147483647, %v904
    %v937 = vand.u32 2147483647, %v905
    %v938 = vand.u32 2147483647, %v906
    %v939 = vand.u32 2147483647, %v907
    %v940 = vsub.f32 0.0, %v924
    %v941 = vsub.f32 0.0, %v925
    %v942 = vsub.f32 0.0, %v926
    %v943 = vsub.f32 0.0, %v927
    %v944 = vsub.f32 0.0, %v928
    %v945 = vsub.f32 0.0, %v929
    %v946 = vsub.f32 0.0, %v930
    %v947 = vsub.f32 0.0, %v931
    %v948 = vsub.f32 0.0, %v932
    %v949 = vsub.f32 0.0, %v933
    %v950 = vsub.f32 0.0, %v934
    %v951 = vsub.f32 0.0, %v935
    %v952 = vsub.f32 0.0, %v936
    %v953 = vsub.f32 0.0, %v937
    %v954 = vsub.f32 0.0, %v938
    %v955 = vsub.f32 0.0, %v939
    %v956 = vmul.f32 %v940, 1.442695
    %v957 = vpow.pop %v956
    %v958 = vmul.f32 %v941, 1.442695
    %v959 = vpow.pop %v958
    %v960 = vmul.f32 %v942, 1.442695
    %v961 = vpow.pop %v960
    %v962 = vmul.f32 %v943, 1.442695
    %v963 = vpow.pop %v962
    %v964 = vmul.f32 %v944, 1.442695
    %v965 = vpow.pop %v964
    %v966 = vmul.f32 %v945, 1.442695
    %v967 = vpow.pop %v966
    %v968 = vmul.f32 %v946, 1.442695
    %v969 = vpow.pop %v968
    %v970 = vmul.f32 %v947, 1.442695
    %v971 = vpow.pop %v970
    %v972 = vmul.f32 %v948, 1.442695
    %v973 = vpow.pop %v972
    %v974 = vmul.f32 %v949, 1.442695
    %v975 = vpow.pop %v974
    %v976 = vmul.f32 %v950, 1.442695
    %v977 = vpow.pop %v976
    %v978 = vmul.f32 %v951, 1.442695
    %v979 = vpow.pop %v978
    %v980 = vmul.f32 %v952, 1.442695
    %v981 = vpow.pop %v980
    %v982 = vmul.f32 %v953, 1.442695
    %v983 = vpow.pop %v982
    %v984 = vmul.f32 %v954, 1.442695
    %v985 = vpow.pop %v984
    %v986 = vmul.f32 %v955, 1.442695
    %v987 = vpow.pop %v986
    %v988 = vadd.f32 %v957, 1.0
    %v989 = vadd.f32 %v959, 1.0
    %v990 = vadd.f32 %v961, 1.0
    %v991 = vadd.f32 %v963, 1.0
    %v992 = vadd.f32 %v965, 1.0
    %v993 = vadd.f32 %v967, 1.0
    %v994 = vadd.f32 %v969, 1.0
    %v995 = vadd.f32 %v971, 1.0
    %v996 = vadd.f32 %v973, 1.0
    %v997 = vadd.f32 %v975, 1.0
    %v998 = vadd.f32 %v977, 1.0
    %v999 = vadd.f32 %v979, 1.0
    %v1000 = vadd.f32 %v981, 1.0
    %v1001 = vadd.f32 %v983, 1.0
    %v1002 = vadd.f32 %v985, 1.0
    %v1003 = vadd.f32 %v987, 1.0
    %v1004 = vlog2.pop %v988
    %v1005 = vmul.f32 %v1004, 0.6931472
    %v1006 = vlog2.pop %v989
    %v1007 = vmul.f32 %v1006, 0.6931472
    %v1008 = vlog2.pop %v990
    %v1009 = vmul.f32 %v1008, 0.6931472
    %v1010 = vlog2.pop %v991
    %v1011 = vmul.f32 %v1010, 0.6931472
    %v1012 = vlog2.pop %v992
    %v1013 = vmul.f32 %v1012, 0.6931472
    %v1014 = vlog2.pop %v993
    %v1015 = vmul.f32 %v1014, 0.6931472
    %v1016 = vlog2.pop %v994
    %v1017 = vmul.f32 %v1016, 0.6931472
    %v1018 = vlog2.pop %v995
    %v1019 = vmul.f32 %v1018, 0.6931472
    %v1020 = vlog2.pop %v996
    %v1021 = vmul.f32 %v1020, 0.6931472
    %v1022 = vlog2.pop %v997
    %v1023 = vmul.f32 %v1022, 0.6931472
    %v1024 = vlog2.pop %v998
    %v1025 = vmul.f32 %v1024, 0.6931472
    %v1026 = vlog2.pop %v999
    %v1027 = vmul.f32 %v1026, 0.6931472
    %v1028 = vlog2.pop %v1000
    %v1029 = vmul.f32 %v1028, 0.6931472
    %v1030 = vlog2.pop %v1001
    %v1031 = vmul.f32 %v1030, 0.6931472
    %v1032 = vlog2.pop %v1002
    %v1033 = vmul.f32 %v1032, 0.6931472
    %v1034 = vlog2.pop %v1003
    %v1035 = vmul.f32 %v1034, 0.6931472
    %v1036 = vadd.f32 %v908, %v1005
    %v1037 = vadd.f32 %v909, %v1007
    %v1038 = vadd.f32 %v910, %v1009
    %v1039 = vadd.f32 %v911, %v1011
    %v1040 = vadd.f32 %v912, %v1013
    %v1041 = vadd.f32 %v913, %v1015
    %v1042 = vadd.f32 %v914, %v1017
    %v1043 = vadd.f32 %v915, %v1019
    %v1044 = vadd.f32 %v916, %v1021
    %v1045 = vadd.f32 %v917, %v1023
    %v1046 = vadd.f32 %v918, %v1025
    %v1047 = vadd.f32 %v919, %v1027
    %v1048 = vadd.f32 %v920, %v1029
    %v1049 = vadd.f32 %v921, %v1031
    %v1050 = vadd.f32 %v922, %v1033
    %v1051 = vadd.f32 %v923, %v1035
    %v1052 = vld [vmem:[%s4] sm:$0xff]
    %v1053 = vld [vmem:[%s4 + $0x8] sm:$0xff]
    %v1054 = vld [vmem:[%s4 + $0x10] sm:$0xff]
    %v1055 = vld [vmem:[%s4 + $0x18] sm:$0xff]
    %v1056 = vld [vmem:[%s5] sm:$0xff]
    %v1057 = vld [vmem:[%s5 + $0x8] sm:$0xff]
    %vm1058 = vcmask 130048
    %v1060 = vsel %vm1058, %v1052, 0
    %v1063 = vsel %vm1058, %v1053, 0
    %v1066 = vsel %vm1058, %v1054, 0
    %v1069 = vsel %vm1058, %v1055, 0
    %1071 = vmatprep.subr.mxu0 0.0
    %1072 = vmatpush1.msra.mxu0 %v1056
    %1073 = vmatprep.subr.mxu0 0.0
    %1074 = vmatpush1.msra.mxu0 %v1057
    %1075 = vmatprep.subr.mxu0 0.0
    %1076 = vmatpush1.msra.mxu0 0.0
    %1077 = vmatprep.subr.mxu0 0.0
    %1078 = vmatpush1.msra.mxu0 0.0
    %1079 = vmatprep.subr.mxu0 0.0
    %1080 = vmatpush1.msra.mxu0 0.0
    %1081 = vmatprep.subr.mxu0 0.0
    %1082 = vmatpush1.msra.mxu0 0.0
    %1083 = vmatprep.subr.mxu0 0.0
    %1084 = vmatpush1.msra.mxu0 0.0
    %1085 = vmatprep.subr.mxu0 0.0
    %1086 = vmatpush1.msra.mxu0 0.0
    %1087 = vmatprep.subr.mxu0 0.0
    %1088 = vmatpush1.msra.mxu0 0.0
    %1089 = vmatprep.subr.mxu0 0.0
    %1090 = vmatpush1.msra.mxu0 0.0
    %1091 = vmatprep.subr.mxu0 0.0
    %1092 = vmatpush1.msra.mxu0 0.0
    %1093 = vmatprep.subr.mxu0 0.0
    %1094 = vmatpush1.msra.mxu0 0.0
    %1095 = vmatprep.subr.mxu0 0.0
    %1096 = vmatpush1.msra.mxu0 0.0
    %1097 = vmatprep.subr.mxu0 0.0
    %1098 = vmatpush1.msra.mxu0 0.0
    %1099 = vmatprep.subr.mxu0 0.0
    %1100 = vmatpush1.msra.mxu0 0.0
    %1101 = vmatprep.subr.mxu0 0.0
    %1102 = vmatpush1.msra.mxu0 0.0
    %1103 = vmatprep.subr.mxu0 0.0
    %1104 = vmatpush1.msra.mxu0 0.0
    %1105 = vmatprep.subr.mxu0 0.0
    %1106 = vmatpush1.msra.mxu0 0.0
    %1107 = vmatprep.subr.mxu0 0.0
    %1108 = vmatpush1.msra.mxu0 0.0
    %1109 = vmatprep.subr.mxu0 0.0
    %1110 = vmatpush1.msra.mxu0 0.0
    %1111 = vmatprep.subr.mxu0 0.0
    %1112 = vmatpush1.msra.mxu0 0.0
    %1113 = vmatprep.subr.mxu0 0.0
    %1114 = vmatpush1.msra.mxu0 0.0
    %1115 = vmatprep.subr.mxu0 0.0
    %1116 = vmatpush1.msra.mxu0 0.0
    %1117 = vmatprep.subr.mxu0 0.0
    %1118 = vmatpush1.msra.mxu0 0.0
    %1119 = vmatprep.subr.mxu0 0.0
    %1120 = vmatpush1.msra.mxu0 0.0
    %1121 = vmatprep.subr.mxu0 0.0
    %1122 = vmatpush1.msra.mxu0 0.0
    %1123 = vmatprep.subr.mxu0 0.0
    %1124 = vmatpush1.msra.mxu0 0.0
    %1125 = vmatprep.subr.mxu0 0.0
    %1126 = vmatpush1.msra.mxu0 0.0
    %1127 = vmatprep.subr.mxu0 0.0
    %1128 = vmatpush1.msra.mxu0 0.0
    %1129 = vmatprep.subr.mxu0 0.0
    %1130 = vmatpush1.msra.mxu0 0.0
    %1131 = vmatprep.subr.mxu0 0.0
    %1132 = vmatpush1.msra.mxu0 0.0
    %1133 = vmatprep.subr.mxu0 0.0
    %1134 = vmatpush1.msra.mxu0 0.0
    %1135 = vmatprep.mubr.f32.mxu0 0.0
    %1136 = vmatmul.mubr.f32.gmra.mrb[0].mxu0 %v1060
    %v1137 = vpop.f32.mrb[0].mxu0
    %v1138 = vadd.f32 0.0, %v1137
    %v1139 = vpop.f32.mrb[0].mxu0
    %1140 = vmatprep.mubr.f32.mxu0 0.0
    %1141 = vmatmul.mubr.f32.gmra.mrb[0].mxu0 %v1063
    %v1142 = vpop.f32.mrb[0].mxu0
    %v1143 = vadd.f32 0.0, %v1142
    %v1144 = vpop.f32.mrb[0].mxu0
    %1145 = vmatprep.mubr.f32.mxu0 0.0
    %1146 = vmatmul.mubr.f32.gmra.mrb[0].mxu0 %v1066
    %v1147 = vpop.f32.mrb[0].mxu0
    %v1148 = vadd.f32 0.0, %v1147
    %v1149 = vpop.f32.mrb[0].mxu0
    %1150 = vmatprep.mubr.f32.mxu0 0.0
    %1151 = vmatmul.mubr.f32.gmra.mrb[0].mxu0 %v1069
    %v1152 = vpop.f32.mrb[0].mxu0
    %v1153 = vadd.f32 0.0, %v1152
    %v1154 = vpop.f32.mrb[0].mxu0
    %1155 = vdwg.mxu0
    %v1156 = vld [vmem:[%s6] sm:$0xff]
    %v1158 = vsel %vm1058, %v1156, 0
    %1160 = vmatprep.subr.mxu0 0.0
    %1161 = vmatpush1.msra.mxu0 %v1138
    %1162 = vmatprep.subr.mxu0 0.0
    %1163 = vmatpush1.msra.mxu0 %v1143
    %1164 = vmatprep.subr.mxu0 0.0
    %1165 = vmatpush1.msra.mxu0 0.0
    %1166 = vmatprep.subr.mxu0 0.0
    %1167 = vmatpush1.msra.mxu0 0.0
    %1168 = vmatprep.subr.mxu0 0.0
    %1169 = vmatpush1.msra.mxu0 0.0
    %1170 = vmatprep.subr.mxu0 0.0
    %1171 = vmatpush1.msra.mxu0 0.0
    %1172 = vmatprep.subr.mxu0 0.0
    %1173 = vmatpush1.msra.mxu0 0.0
    %1174 = vmatprep.subr.mxu0 0.0
    %1175 = vmatpush1.msra.mxu0 0.0
    %1176 = vmatprep.subr.mxu0 0.0
    %1177 = vmatpush1.msra.mxu0 0.0
    %1178 = vmatprep.subr.mxu0 0.0
    %1179 = vmatpush1.msra.mxu0 0.0
    %1180 = vmatprep.subr.mxu0 0.0
    %1181 = vmatpush1.msra.mxu0 0.0
    %1182 = vmatprep.subr.mxu0 0.0
    %1183 = vmatpush1.msra.mxu0 0.0
    %1184 = vmatprep.subr.mxu0 0.0
    %1185 = vmatpush1.msra.mxu0 0.0
    %1186 = vmatprep.subr.mxu0 0.0
    %1187 = vmatpush1.msra.mxu0 0.0
    %1188 = vmatprep.subr.mxu0 0.0
    %1189 = vmatpush1.msra.mxu0 0.0
    %1190 = vmatprep.subr.mxu0 0.0
    %1191 = vmatpush1.msra.mxu0 0.0
    %1192 = vmatprep.subr.mxu0 0.0
    %1193 = vmatpush1.msra.mxu0 0.0
    %1194 = vmatprep.subr.mxu0 0.0
    %1195 = vmatpush1.msra.mxu0 0.0
    %1196 = vmatprep.subr.mxu0 0.0
    %1197 = vmatpush1.msra.mxu0 0.0
    %1198 = vmatprep.subr.mxu0 0.0
    %1199 = vmatpush1.msra.mxu0 0.0
    %1200 = vmatprep.subr.mxu0 0.0
    %1201 = vmatpush1.msra.mxu0 0.0
    %1202 = vmatprep.subr.mxu0 0.0
    %1203 = vmatpush1.msra.mxu0 0.0
    %1204 = vmatprep.subr.mxu0 0.0
    %1205 = vmatpush1.msra.mxu0 0.0
    %1206 = vmatprep.subr.mxu0 0.0
    %1207 = vmatpush1.msra.mxu0 0.0
    %1208 = vmatprep.subr.mxu0 0.0
    %1209 = vmatpush1.msra.mxu0 0.0
    %1210 = vmatprep.subr.mxu0 0.0
    %1211 = vmatpush1.msra.mxu0 0.0
    %1212 = vmatprep.subr.mxu0 0.0
    %1213 = vmatpush1.msra.mxu0 0.0
    %1214 = vmatprep.subr.mxu0 0.0
    %1215 = vmatpush1.msra.mxu0 0.0
    %1216 = vmatprep.subr.mxu0 0.0
    %1217 = vmatpush1.msra.mxu0 0.0
    %1218 = vmatprep.subr.mxu0 0.0
    %1219 = vmatpush1.msra.mxu0 0.0
    %1220 = vmatprep.subr.mxu0 0.0
    %1221 = vmatpush1.msra.mxu0 0.0
    %1222 = vmatprep.subr.mxu0 0.0
    %1223 = vmatpush1.msra.mxu0 0.0
    %1224 = vmatprep.mubr.f32.mxu0 0.0
    %1225 = vmatmul.mubr.f32.gmra.mrb[0].mxu0 %v1158
    %v1226 = vpop.f32.mrb[0].mxu0
    %v1227 = vadd.f32 0.0, %v1226
    %v1228 = vpop.f32.mrb[0].mxu0
    %1229 = vdwg.mxu0
    %1230 = vmatprep.subr.mxu0 0.0
    %1231 = vmatpush1.msra.mxu0 %v1148
    %1232 = vmatprep.subr.mxu0 0.0
    %1233 = vmatpush1.msra.mxu0 %v1153
    %1234 = vmatprep.subr.mxu0 0.0
    %1235 = vmatpush1.msra.mxu0 0.0
    %1236 = vmatprep.subr.mxu0 0.0
    %1237 = vmatpush1.msra.mxu0 0.0
    %1238 = vmatprep.subr.mxu0 0.0
    %1239 = vmatpush1.msra.mxu0 0.0
    %1240 = vmatprep.subr.mxu0 0.0
    %1241 = vmatpush1.msra.mxu0 0.0
    %1242 = vmatprep.subr.mxu0 0.0
    %1243 = vmatpush1.msra.mxu0 0.0
    %1244 = vmatprep.subr.mxu0 0.0
    %1245 = vmatpush1.msra.mxu0 0.0
    %1246 = vmatprep.subr.mxu0 0.0
    %1247 = vmatpush1.msra.mxu0 0.0
    %1248 = vmatprep.subr.mxu0 0.0
    %1249 = vmatpush1.msra.mxu0 0.0
    %1250 = vmatprep.subr.mxu0 0.0
    %1251 = vmatpush1.msra.mxu0 0.0
    %1252 = vmatprep.subr.mxu0 0.0
    %1253 = vmatpush1.msra.mxu0 0.0
    %1254 = vmatprep.subr.mxu0 0.0
    %1255 = vmatpush1.msra.mxu0 0.0
    %1256 = vmatprep.subr.mxu0 0.0
    %1257 = vmatpush1.msra.mxu0 0.0
    %1258 = vmatprep.subr.mxu0 0.0
    %1259 = vmatpush1.msra.mxu0 0.0
    %1260 = vmatprep.subr.mxu0 0.0
    %1261 = vmatpush1.msra.mxu0 0.0
    %1262 = vmatprep.subr.mxu0 0.0
    %1263 = vmatpush1.msra.mxu0 0.0
    %1264 = vmatprep.subr.mxu0 0.0
    %1265 = vmatpush1.msra.mxu0 0.0
    %1266 = vmatprep.subr.mxu0 0.0
    %1267 = vmatpush1.msra.mxu0 0.0
    %1268 = vmatprep.subr.mxu0 0.0
    %1269 = vmatpush1.msra.mxu0 0.0
    %1270 = vmatprep.subr.mxu0 0.0
    %1271 = vmatpush1.msra.mxu0 0.0
    %1272 = vmatprep.subr.mxu0 0.0
    %1273 = vmatpush1.msra.mxu0 0.0
    %1274 = vmatprep.subr.mxu0 0.0
    %1275 = vmatpush1.msra.mxu0 0.0
    %1276 = vmatprep.subr.mxu0 0.0
    %1277 = vmatpush1.msra.mxu0 0.0
    %1278 = vmatprep.subr.mxu0 0.0
    %1279 = vmatpush1.msra.mxu0 0.0
    %1280 = vmatprep.subr.mxu0 0.0
    %1281 = vmatpush1.msra.mxu0 0.0
    %1282 = vmatprep.subr.mxu0 0.0
    %1283 = vmatpush1.msra.mxu0 0.0
    %1284 = vmatprep.subr.mxu0 0.0
    %1285 = vmatpush1.msra.mxu0 0.0
    %1286 = vmatprep.subr.mxu0 0.0
    %1287 = vmatpush1.msra.mxu0 0.0
    %1288 = vmatprep.subr.mxu0 0.0
    %1289 = vmatpush1.msra.mxu0 0.0
    %1290 = vmatprep.subr.mxu0 0.0
    %1291 = vmatpush1.msra.mxu0 0.0
    %1292 = vmatprep.subr.mxu0 0.0
    %1293 = vmatpush1.msra.mxu0 0.0
    %1294 = vmatprep.mubr.f32.mxu0 0.0
    %1295 = vmatmul.mubr.f32.gmra.mrb[0].mxu0 %v1158
    %v1296 = vpop.f32.mrb[0].mxu0
    %v1297 = vadd.f32 0.0, %v1296
    %v1298 = vpop.f32.mrb[0].mxu0
    %1299 = vdwg.mxu0
    %v1302 = vlaneseq
    %v1303 = vshrl.u32 %v1302, 7
    %v1304 = vsub.s32 0, %v1303
    %v1305 = vrot.slane %v1227, %v1304
    %1307 = vbcast.lane.b32.xlu0 %v1305, 256
    %v1308 = vpop.permute.xlu0 %1307
    %v1309 = vlaneseq
    %v1310 = vshrl.u32 %v1309, 7
    %v1311 = vsub.s32 1, %v1310
    %v1312 = vrot.slane %v1227, %v1311
    %1314 = vbcast.lane.b32.xlu0 %v1312, 256
    %v1315 = vpop.permute.xlu0 %1314
    %v1316 = vlaneseq
    %v1317 = vshrl.u32 %v1316, 7
    %v1318 = vsub.s32 2, %v1317
    %v1319 = vrot.slane %v1227, %v1318
    %1321 = vbcast.lane.b32.xlu0 %v1319, 256
    %v1322 = vpop.permute.xlu0 %1321
    %v1323 = vlaneseq
    %v1324 = vshrl.u32 %v1323, 7
    %v1325 = vsub.s32 3, %v1324
    %v1326 = vrot.slane %v1227, %v1325
    %1328 = vbcast.lane.b32.xlu0 %v1326, 256
    %v1329 = vpop.permute.xlu0 %1328
    %v1330 = vlaneseq
    %v1331 = vshrl.u32 %v1330, 7
    %v1332 = vsub.s32 4, %v1331
    %v1333 = vrot.slane %v1227, %v1332
    %1335 = vbcast.lane.b32.xlu0 %v1333, 256
    %v1336 = vpop.permute.xlu0 %1335
    %v1337 = vlaneseq
    %v1338 = vshrl.u32 %v1337, 7
    %v1339 = vsub.s32 5, %v1338
    %v1340 = vrot.slane %v1227, %v1339
    %1342 = vbcast.lane.b32.xlu0 %v1340, 256
    %v1343 = vpop.permute.xlu0 %1342
    %v1344 = vlaneseq
    %v1345 = vshrl.u32 %v1344, 7
    %v1346 = vsub.s32 6, %v1345
    %v1347 = vrot.slane %v1227, %v1346
    %1349 = vbcast.lane.b32.xlu0 %v1347, 256
    %v1350 = vpop.permute.xlu0 %1349
    %v1351 = vlaneseq
    %v1352 = vshrl.u32 %v1351, 7
    %v1353 = vsub.s32 7, %v1352
    %v1354 = vrot.slane %v1227, %v1353
    %1356 = vbcast.lane.b32.xlu0 %v1354, 256
    %v1357 = vpop.permute.xlu0 %1356
    %v1358 = vlaneseq
    %v1359 = vshrl.u32 %v1358, 7
    %v1360 = vsub.s32 0, %v1359
    %v1361 = vrot.slane %v1297, %v1360
    %1363 = vbcast.lane.b32.xlu0 %v1361, 256
    %v1364 = vpop.permute.xlu0 %1363
    %v1365 = vlaneseq
    %v1366 = vshrl.u32 %v1365, 7
    %v1367 = vsub.s32 1, %v1366
    %v1368 = vrot.slane %v1297, %v1367
    %1370 = vbcast.lane.b32.xlu0 %v1368, 256
    %v1371 = vpop.permute.xlu0 %1370
    %v1372 = vlaneseq
    %v1373 = vshrl.u32 %v1372, 7
    %v1374 = vsub.s32 2, %v1373
    %v1375 = vrot.slane %v1297, %v1374
    %1377 = vbcast.lane.b32.xlu0 %v1375, 256
    %v1378 = vpop.permute.xlu0 %1377
    %v1379 = vlaneseq
    %v1380 = vshrl.u32 %v1379, 7
    %v1381 = vsub.s32 3, %v1380
    %v1382 = vrot.slane %v1297, %v1381
    %1384 = vbcast.lane.b32.xlu0 %v1382, 256
    %v1385 = vpop.permute.xlu0 %1384
    %v1386 = vlaneseq
    %v1387 = vshrl.u32 %v1386, 7
    %v1388 = vsub.s32 4, %v1387
    %v1389 = vrot.slane %v1297, %v1388
    %1391 = vbcast.lane.b32.xlu0 %v1389, 256
    %v1392 = vpop.permute.xlu0 %1391
    %v1393 = vlaneseq
    %v1394 = vshrl.u32 %v1393, 7
    %v1395 = vsub.s32 5, %v1394
    %v1396 = vrot.slane %v1297, %v1395
    %1398 = vbcast.lane.b32.xlu0 %v1396, 256
    %v1399 = vpop.permute.xlu0 %1398
    %v1400 = vlaneseq
    %v1401 = vshrl.u32 %v1400, 7
    %v1402 = vsub.s32 6, %v1401
    %v1403 = vrot.slane %v1297, %v1402
    %1405 = vbcast.lane.b32.xlu0 %v1403, 256
    %v1406 = vpop.permute.xlu0 %1405
    %v1407 = vlaneseq
    %v1408 = vshrl.u32 %v1407, 7
    %v1409 = vsub.s32 7, %v1408
    %v1410 = vrot.slane %v1297, %v1409
    %1412 = vbcast.lane.b32.xlu0 %v1410, 256
    %v1413 = vpop.permute.xlu0 %1412
    %v1430 = vmul.f32 %v1036, %v1308
    %v1431 = vmul.f32 %v1037, %v1315
    %v1432 = vmul.f32 %v1038, %v1322
    %v1433 = vmul.f32 %v1039, %v1329
    %v1434 = vmul.f32 %v1040, %v1336
    %v1435 = vmul.f32 %v1041, %v1343
    %v1436 = vmul.f32 %v1042, %v1350
    %v1437 = vmul.f32 %v1043, %v1357
    %v1438 = vmul.f32 %v1044, %v1364
    %v1439 = vmul.f32 %v1045, %v1371
    %v1440 = vmul.f32 %v1046, %v1378
    %v1441 = vmul.f32 %v1047, %v1385
    %v1442 = vmul.f32 %v1048, %v1392
    %v1443 = vmul.f32 %v1049, %v1399
    %v1444 = vmul.f32 %v1050, %v1406
    %v1445 = vmul.f32 %v1051, %v1413
    %1462 = vset.pattern.permute.xlu0 0
    %1463 = vperm.xlu0 %1462, %v1430
    %v1464 = vpop.permute.xlu0 %1463
    %1465 = vset.pattern.permute.xlu0 0
    %1466 = vperm.xlu0 %1465, %v1431
    %v1467 = vpop.permute.xlu0 %1466
    %1468 = vset.pattern.permute.xlu0 0
    %1469 = vperm.xlu0 %1468, %v1432
    %v1470 = vpop.permute.xlu0 %1469
    %1471 = vset.pattern.permute.xlu0 0
    %1472 = vperm.xlu0 %1471, %v1433
    %v1473 = vpop.permute.xlu0 %1472
    %1474 = vset.pattern.permute.xlu0 0
    %1475 = vperm.xlu0 %1474, %v1434
    %v1476 = vpop.permute.xlu0 %1475
    %1477 = vset.pattern.permute.xlu0 0
    %1478 = vperm.xlu0 %1477, %v1435
    %v1479 = vpop.permute.xlu0 %1478
    %1480 = vset.pattern.permute.xlu0 0
    %1481 = vperm.xlu0 %1480, %v1436
    %v1482 = vpop.permute.xlu0 %1481
    %1483 = vset.pattern.permute.xlu0 0
    %1484 = vperm.xlu0 %1483, %v1437
    %v1485 = vpop.permute.xlu0 %1484
    %1486 = vset.pattern.permute.xlu0 0
    %1487 = vperm.xlu0 %1486, %v1438
    %v1488 = vpop.permute.xlu0 %1487
    %1489 = vset.pattern.permute.xlu0 0
    %1490 = vperm.xlu0 %1489, %v1439
    %v1491 = vpop.permute.xlu0 %1490
    %1492 = vset.pattern.permute.xlu0 0
    %1493 = vperm.xlu0 %1492, %v1440
    %v1494 = vpop.permute.xlu0 %1493
    %1495 = vset.pattern.permute.xlu0 0
    %1496 = vperm.xlu0 %1495, %v1441
    %v1497 = vpop.permute.xlu0 %1496
    %1498 = vset.pattern.permute.xlu0 0
    %1499 = vperm.xlu0 %1498, %v1442
    %v1500 = vpop.permute.xlu0 %1499
    %1501 = vset.pattern.permute.xlu0 0
    %1502 = vperm.xlu0 %1501, %v1443
    %v1503 = vpop.permute.xlu0 %1502
    %1504 = vset.pattern.permute.xlu0 0
    %1505 = vperm.xlu0 %1504, %v1444
    %v1506 = vpop.permute.xlu0 %1505
    %1507 = vset.pattern.permute.xlu0 0
    %1508 = vperm.xlu0 %1507, %v1445
    %v1509 = vpop.permute.xlu0 %1508
    %v1510 = vlaneseq
    %v1511 = vand.u32 %v1510, 127
    %v1512 = vlaneseq
    %v1513 = vshrl.u32 %v1512, 7
    %v1514 = vsub.s32 %v1511, %v1513
    %v1515 = vrot.slane %v1464, %v1514
    %v1516 = vlaneseq
    %v1517 = vshrl.u32 %v1516, 7
    %v1518 = vsub.s32 %v1511, %v1517
    %v1519 = vrot.slane %v1467, %v1518
    %v1520 = vlaneseq
    %v1521 = vshrl.u32 %v1520, 7
    %v1522 = vsub.s32 %v1511, %v1521
    %v1523 = vrot.slane %v1470, %v1522
    %v1524 = vlaneseq
    %v1525 = vshrl.u32 %v1524, 7
    %v1526 = vsub.s32 %v1511, %v1525
    %v1527 = vrot.slane %v1473, %v1526
    %v1528 = vlaneseq
    %v1529 = vshrl.u32 %v1528, 7
    %v1530 = vsub.s32 %v1511, %v1529
    %v1531 = vrot.slane %v1476, %v1530
    %v1532 = vlaneseq
    %v1533 = vshrl.u32 %v1532, 7
    %v1534 = vsub.s32 %v1511, %v1533
    %v1535 = vrot.slane %v1479, %v1534
    %v1536 = vlaneseq
    %v1537 = vshrl.u32 %v1536, 7
    %v1538 = vsub.s32 %v1511, %v1537
    %v1539 = vrot.slane %v1482, %v1538
    %v1540 = vlaneseq
    %v1541 = vshrl.u32 %v1540, 7
    %v1542 = vsub.s32 %v1511, %v1541
    %v1543 = vrot.slane %v1485, %v1542
    %v1544 = vlaneseq
    %v1545 = vshrl.u32 %v1544, 7
    %v1546 = vsub.s32 %v1511, %v1545
    %v1547 = vrot.slane %v1488, %v1546
    %v1548 = vlaneseq
    %v1549 = vshrl.u32 %v1548, 7
    %v1550 = vsub.s32 %v1511, %v1549
    %v1551 = vrot.slane %v1491, %v1550
    %v1552 = vlaneseq
    %v1553 = vshrl.u32 %v1552, 7
    %v1554 = vsub.s32 %v1511, %v1553
    %v1555 = vrot.slane %v1494, %v1554
    %v1556 = vlaneseq
    %v1557 = vshrl.u32 %v1556, 7
    %v1558 = vsub.s32 %v1511, %v1557
    %v1559 = vrot.slane %v1497, %v1558
    %v1560 = vlaneseq
    %v1561 = vshrl.u32 %v1560, 7
    %v1562 = vsub.s32 %v1511, %v1561
    %v1563 = vrot.slane %v1500, %v1562
    %v1564 = vlaneseq
    %v1565 = vshrl.u32 %v1564, 7
    %v1566 = vsub.s32 %v1511, %v1565
    %v1567 = vrot.slane %v1503, %v1566
    %v1568 = vlaneseq
    %v1569 = vshrl.u32 %v1568, 7
    %v1570 = vsub.s32 %v1511, %v1569
    %v1571 = vrot.slane %v1506, %v1570
    %v1572 = vlaneseq
    %v1573 = vshrl.u32 %v1572, 7
    %v1574 = vsub.s32 %v1511, %v1573
    %v1575 = vrot.slane %v1509, %v1574
    %vm1576 = vcmask 1041409
    %v1577 = vsel %vm1576, %v1519, %v1515
    %vm1578 = vcmask 1042434
    %v1579 = vsel %vm1578, %v1523, %v1577
    %vm1580 = vcmask 1043459
    %v1581 = vsel %vm1580, %v1527, %v1579
    %vm1582 = vcmask 1044484
    %v1583 = vsel %vm1582, %v1531, %v1581
    %vm1584 = vcmask 1045509
    %v1585 = vsel %vm1584, %v1535, %v1583
    %vm1586 = vcmask 1046534
    %v1587 = vsel %vm1586, %v1539, %v1585
    %vm1588 = vcmask 1047559
    %v1589 = vsel %vm1588, %v1543, %v1587
    %v1590 = vsel %vm1576, %v1551, %v1547
    %v1591 = vsel %vm1578, %v1555, %v1590
    %v1592 = vsel %vm1580, %v1559, %v1591
    %v1593 = vsel %vm1582, %v1563, %v1592
    %v1594 = vsel %vm1584, %v1567, %v1593
    %v1595 = vsel %vm1586, %v1571, %v1594
    %v1596 = vsel %vm1588, %v1575, %v1595
    %vm1599 = vcmask 64512
    %v1600 = vsel %vm1599, %v1589, 0.0
    %v1601 = vsel %vm1599, %v1596, 0.0
    %v1602 = vadd.f32 %v1600, %v1601
    %1603 = vadd.xlane.f32.xlu0 %v1602
    %v1604 = vpop.xlane.xlu0 %1603
    %v1605 = vrot.slane %v1604, 4
    %v1606 = vadd.f32 %v1604, %v1605
    %v1607 = vrot.slane %v1606, 2
    %v1608 = vadd.f32 %v1606, %v1607
    %v1609 = vrot.slane %v1608, 1
    %v1610 = vadd.f32 %v1608, %v1609
    %s1611 = vtos %v1610
    %s1612 = smul.f32 %s1611, 0.0078125
    %v1613 = vstv %s1612
    %vm1614 = vcmask 0
    %1615 = vst.msk [vmem:[#allocation4] sm:$0x1] %vm1614, %v1613
    // Predicated region
    $region30: #{generator_adversarial_loss.1} parent=1 // pred_check
      _
    $region31: #{generator_adversarial_loss.1} parent=1 // pred_check_branch
      %1617 = sbr.rel (0) target = $region33
    $region32: #{generator_adversarial_loss.1} parent=1 // pred_region
      %s1619 = ssub.s32 16, 16
      %1620 = vsyncadd [#allocation5], %s1619
      %s1622 = sshll.u32 [#allocation4], 4
      %s1623 = int_to_ptr.vmem [resolvable:$true] %s1622
      %1625 = dma.vmem_to_hbm [thread:$0]  %s1623, 16, %s7, [#allocation5]
    $region33: #{generator_adversarial_loss.1} parent=1 // pred_fallthru
      _
    // Predicated region
    $region34: #{generator_adversarial_loss.1} parent=1 // pred_check
      _
    $region35: #{generator_adversarial_loss.1} parent=1 // pred_check_branch
      %1627 = sbr.rel (0) target = $region37
    $region36: #{generator_adversarial_loss.1} parent=1 // pred_region
      %1628 = dma.done [#allocation5], 16
    $region37: #{generator_adversarial_loss.1} parent=1 // pred_fallthru
      _
    %1629 = vsyncpa [#allocation5], 1

</llo_original>
